<compile_context>
chip_gen: v7x
topology: tpu7x:2x2x1
jax: 0.10.0
libtpu: 0.0.40
codegen_flags: <defaults>
</compile_context>

<pallas_src>
import jax
import jax.numpy as jnp
from jax.experimental import pallas as pl
from jax.experimental.pallas import tpu as pltpu


def _round_up(x, m):
    return (x + m - 1) // m * m


def make_combined_kernel(*, num_layers, seq_len, batch, hidden, in_dims,
                         lstm_offsets, head_offsets, fnn_pad, head_lanes):
    """Builds the Pallas kernel body (layer/time loops unrolled at trace time;
    T*L is small here — switch to lax.fori_loop if T or num_layers grow)."""
    H, B, T = hidden, batch, seq_len
    fw_off, fb_off, ff_off, fr_off, fbias_off = head_offsets

    def kernel(nonseq_ref, seq_ref, lstm_ref, head_ref, out_ref, hs_ref):
        # ---------- FNN branch: relu(x @ W + b), computed in padded 128-lane space ----------
        fnn_w = head_ref[fw_off:fw_off + fnn_pad, :]           # [fnn_pad, 128] (zero padded)
        fnn_b = head_ref[fb_off:fb_off + 1, :]                 # [1, 128]
        fnn_act = jnp.maximum(
            jnp.dot(nonseq_ref[...], fnn_w, preferred_element_type=jnp.float32) + fnn_b,
            0.0)                                               # [B, 128]; padded cols are exactly 0

        # ---------- stacked LSTM (PyTorch gate order i, f, g, o) ----------
        # time-major flatten: row t*B + b is timestep t, sample b
        x_all = seq_ref[...].reshape(T * B, in_dims[0])
        h = jnp.zeros((B, H), jnp.float32)
        for l in range(num_layers):
            ih_off, hh_off, b_off = lstm_offsets[l]
            w_ih = lstm_ref[ih_off:ih_off + in_dims[l], :]     # [in_dim, 4H]
            w_hh = lstm_ref[hh_off:hh_off + H, :]              # [H, 4H]
            b = lstm_ref[b_off:b_off + 1, :]                   # [1, 4H]

            # Input-to-hidden projection for ALL timesteps in one MXU pass, bias folded in.
            x_proj = jnp.dot(x_all, w_ih, preferred_element_type=jnp.float32) + b  # [T*B, 4H]

            h = jnp.zeros((B, H), jnp.float32)
            c = jnp.zeros((B, H), jnp.float32)
            for t in range(T):
                gates = x_proj[t * B:(t + 1) * B, :] + jnp.dot(
                    h, w_hh, preferred_element_type=jnp.float32)      # [B, 4H]
                sg = jax.nn.sigmoid(gates)                             # one full-vreg EUP pass
                i_g = sg[:, 0 * H:1 * H]
                f_g = sg[:, 1 * H:2 * H]
                o_g = sg[:, 3 * H:4 * H]
                g_g = jnp.tanh(gates[:, 2 * H:3 * H])
                c = f_g * c + i_g * g_g
                h = o_g * jnp.tanh(c)
                hs_ref[t, :, :] = h                                    # per-step h -> VMEM scratch
            # next layer consumes all timesteps of this layer's output
            x_all = hs_ref[...].reshape(T * B, H)

        last_h = h                                             # == RNNOut[:, -1, :]

        # ---------- final Linear on concat([fnn_out, last_h]) + sigmoid (split matmul) ----------
        fin_w_f = head_ref[ff_off:ff_off + head_lanes, :]      # [128, 128] (rows >=50 are 0)
        fin_w_r = head_ref[fr_off:fr_off + H, :]               # [H, 128]
        fin_b = head_ref[fbias_off:fbias_off + 1, :]           # [1, 128]
        logits = (jnp.dot(fnn_act, fin_w_f, preferred_element_type=jnp.float32)
                  + jnp.dot(last_h, fin_w_r, preferred_element_type=jnp.float32)
                  + fin_b)
        out_ref[...] = jax.nn.sigmoid(logits)                  # lane-dense [B, 128] store

    return kernel


def combined_model_forward(nonseq, seq, params, *, num_layers, hidden, output):
    """Packs params into two flat VMEM buffers, transposes seq to time-major,
    and runs the whole forward pass in a single Pallas kernel invocation."""
    B, T, rnn_in = seq.shape
    H = hidden
    FNNDim = nonseq.shape[1]
    fnn_hidden = 50                                   # nn.Linear(FNNDim, 50)

    fnn_pad = _round_up(FNNDim, 8)
    head_lanes = _round_up(max(fnn_hidden, output), 128)       # 128
    H_pad = _round_up(H, 8)

    # ---- host-side layout plumbing (in a real model, pack weights once, not per call) ----
    nonseq_p = jnp.zeros((B, fnn_pad), jnp.float32).at[:, :FNNDim].set(nonseq)
    seq_t = jnp.transpose(seq, (1, 0, 2))             # [T, B, rnn_in] time-major

    # LSTM pack: per layer [w_ih(in_dim rows) | w_hh(H rows) | bias(8 rows, row 0 used)], 4H lanes
    in_dims = [rnn_in] + [H] * (num_layers - 1)
    rows = 0
    lstm_offsets = []
    for l in range(num_layers):
        ih = rows; rows += in_dims[l]
        hh = rows; rows += H
        bo = rows; rows += 8
        lstm_offsets.append((ih, hh, bo))
    lstm_pack = jnp.zeros((rows, 4 * H), jnp.float32)
    for l, (ih, hh, bo) in enumerate(lstm_offsets):
        lstm_pack = lstm_pack.at[ih:ih + in_dims[l], :].set(params[f"w_ih_{l}"])
        lstm_pack = lstm_pack.at[hh:hh + H, :].set(params[f"w_hh_{l}"])
        lstm_pack = lstm_pack.at[bo:bo + 1, :].set(params[f"b_{l}"])

    # Head pack: [fnn_w | fnn_b | fin_w_fnn | fin_w_rnn | fin_b], zero padded, 128 lanes wide.
    fw_off = 0
    fb_off = fw_off + fnn_pad
    ff_off = fb_off + 8
    fr_off = ff_off + head_lanes
    fbias_off = fr_off + H_pad
    head_rows = fbias_off + 8
    head_pack = jnp.zeros((head_rows, head_lanes), jnp.float32)
    head_pack = head_pack.at[fw_off:fw_off + FNNDim, :fnn_hidden].set(params["fnn_w"])
    head_pack = head_pack.at[fb_off:fb_off + 1, :fnn_hidden].set(params["fnn_b"])
    head_pack = head_pack.at[ff_off:ff_off + fnn_hidden, :output].set(params["fin_w_fnn"])
    head_pack = head_pack.at[fr_off:fr_off + H, :output].set(params["fin_w_rnn"])
    head_pack = head_pack.at[fbias_off:fbias_off + 1, :output].set(params["fin_b"])

    kernel = make_combined_kernel(
        num_layers=num_layers, seq_len=T, batch=B, hidden=H, in_dims=in_dims,
        lstm_offsets=lstm_offsets,
        head_offsets=(fw_off, fb_off, ff_off, fr_off, fbias_off),
        fnn_pad=fnn_pad, head_lanes=head_lanes)

    # Advisory cost estimate for XLA scheduling around this tiny custom call.
    flops = 2 * B * fnn_pad * head_lanes
    for l in range(num_layers):
        flops += 2 * (T * B) * in_dims[l] * 4 * H      # batched x @ w_ih
        flops += T * 2 * B * H * 4 * H                 # recurrent h @ w_hh
    flops += 2 * B * head_lanes * head_lanes + 2 * B * H * head_lanes
    transcendentals = num_layers * T * (B * 4 * H + 2 * B * H) + B * head_lanes
    bytes_accessed = 4 * (nonseq_p.size + seq_t.size + lstm_pack.size
                          + head_pack.size + B * head_lanes)

    vmem = pl.BlockSpec(memory_space=pltpu.MemorySpace.VMEM)
    out_padded = pl.pallas_call(
        kernel,
        out_shape=jax.ShapeDtypeStruct((B, head_lanes), jnp.float32),
        in_specs=[vmem, vmem, vmem, vmem],
        out_specs=vmem,
        scratch_shapes=[pltpu.VMEM((T, B, H), jnp.float32)],
        cost_estimate=pl.CostEstimate(flops=flops,
                                      transcendentals=transcendentals,
                                      bytes_accessed=bytes_accessed),
    )(nonseq_p, seq_t, lstm_pack, head_pack)
    # TODO(synk): if batch grows, add a grid over B with dimension_semantics=("parallel",)
    # so v7x's two TensorCores split the batch; pointless at B=2.
    return out_padded[:, :output]


def reference_forward(nonseq, seq, params, *, num_layers, hidden):
    """Pure-JAX reference matching PyTorch CombinedModel.forward semantics."""
    fnn_out = jnp.maximum(nonseq @ params["fnn_w"] + params["fnn_b"], 0.0)
    xs = seq
    B, T, _ = seq.shape
    for l in range(num_layers):
        w_ih, w_hh, b = params[f"w_ih_{l}"], params[f"w_hh_{l}"], params[f"b_{l}"]
        h = jnp.zeros((B, hidden), jnp.float32)
        c = jnp.zeros((B, hidden), jnp.float32)
        outs = []
        for t in range(T):
            gates = xs[:, t, :] @ w_ih + h @ w_hh + b
            i_g = jax.nn.sigmoid(gates[:, 0 * hidden:1 * hidden])
            f_g = jax.nn.sigmoid(gates[:, 1 * hidden:2 * hidden])
            g_g = jnp.tanh(gates[:, 2 * hidden:3 * hidden])
            o_g = jax.nn.sigmoid(gates[:, 3 * hidden:4 * hidden])
            c = f_g * c + i_g * g_g
            h = o_g * jnp.tanh(c)
            outs.append(h)
        xs = jnp.stack(outs, axis=1)
    last_h = xs[:, -1, :]
    logits = fnn_out @ params["fin_w_fnn"] + last_h @ params["fin_w_rnn"] + params["fin_b"]
    return jax.nn.sigmoid(logits)


def init_params(key, *, FNNDim, RNNDim, hidden, output, layers):
    """Deterministic synthetic init (uniform +/- 1/sqrt(fan_in), like torch defaults)."""
    params = {}

    def uni(k, shape, fan_in):
        bound = 1.0 / jnp.sqrt(jnp.float32(fan_in))
        return jax.random.uniform(k, shape, jnp.float32, -bound, bound)

    keys = jax.random.split(key, 6 + 4 * layers)
    ki = iter(range(len(keys)))

    params["fnn_w"] = uni(keys[next(ki)], (FNNDim, 50), FNNDim)
    params["fnn_b"] = uni(keys[next(ki)], (1, 50), FNNDim)

    for l in range(layers):
        in_dim = RNNDim if l == 0 else hidden
        params[f"w_ih_{l}"] = uni(keys[next(ki)], (in_dim, 4 * hidden), hidden)
        params[f"w_hh_{l}"] = uni(keys[next(ki)], (hidden, 4 * hidden), hidden)
        b_ih = uni(keys[next(ki)], (1, 4 * hidden), hidden)
        b_hh = uni(keys[next(ki)], (1, 4 * hidden), hidden)
        params[f"b_{l}"] = b_ih + b_hh  # PyTorch adds both LSTM biases

    params["fin_w_fnn"] = uni(keys[next(ki)], (50, output), 50 + hidden)
    extra = jax.random.split(keys[-1], 2)
    params["fin_w_rnn"] = uni(extra[0], (hidden, output), 50 + hidden)
    params["fin_b"] = uni(extra[1], (1, output), 50 + hidden)
    return params


if __name__ == "__main__":
    B, T = 2, 8
    FNNDim, RNNDim, hidden, output, layers = 20, 16, 32, 5, 2

    root = jax.random.PRNGKey(0)
    k_nonseq, k_seq, k_params = jax.random.split(root, 3)

    nonseq = jax.random.normal(k_nonseq, (B, FNNDim), jnp.float32)
    seq = jax.random.normal(k_seq, (B, T, RNNDim), jnp.float32)
    params = init_params(k_params, FNNDim=FNNDim, RNNDim=RNNDim,
                         hidden=hidden, output=output, layers=layers)

    out = combined_model_forward(nonseq, seq, params,
                                 num_layers=layers, hidden=hidden, output=output)
    out = jax.block_until_ready(out)

    ref = reference_forward(nonseq, seq, params, num_layers=layers, hidden=hidden)
    assert out.shape == (B, output)
    assert jnp.allclose(out, ref, atol=1e-5, rtol=1e-5), "Pallas kernel mismatch vs JAX reference"

    print("KERNEL_OK")
</pallas_src>

<mosaic_0001>
module attributes {stable_mosaic.version = 11 : i64} {
  func.func @kernel(%arg0: memref<2x24xf32, #tpu.memory_space<vmem>>, %arg1: memref<8x2x16xf32, #tpu.memory_space<vmem>>, %arg2: memref<128x128xf32, #tpu.memory_space<vmem>>, %arg3: memref<200x128xf32, #tpu.memory_space<vmem>>, %arg4: memref<2x128xf32, #tpu.memory_space<vmem>>, %arg5: memref<8x2x32xf32, #tpu.memory_space<vmem>>) attributes {dimension_semantics = [], scalar_prefetch = 0 : i64, scratch_operands = 1 : i64, tpu.core_type = #tpu.core_type<tc>} {
    %c0 = arith.constant 0 : index
    %c0_0 = arith.constant 0 : index
    %0 = vector.load %arg3[%c0, %c0_0] : memref<200x128xf32, #tpu.memory_space<vmem>>, vector<24x128xf32>
    %c24 = arith.constant 24 : index
    %c0_1 = arith.constant 0 : index
    %1 = vector.load %arg3[%c24, %c0_1] : memref<200x128xf32, #tpu.memory_space<vmem>>, vector<1x128xf32>
    %c0_2 = arith.constant 0 : index
    %c0_3 = arith.constant 0 : index
    %2 = vector.load %arg0[%c0_2, %c0_3] : memref<2x24xf32, #tpu.memory_space<vmem>>, vector<2x24xf32>
    %cst = arith.constant dense<0.000000e+00> : vector<2x128xf32>
    %3 = tpu.matmul %2, %0, %cst {dimension_numbers = #tpu.dot_dimension_numbers<[1], [0], [0], [1], [0, 0, 1, 1], [], []>} : vector<2x24xf32>, vector<24x128xf32>, vector<2x128xf32> -> vector<2x128xf32>
    %4 = vector.broadcast %1 : vector<1x128xf32> to vector<2x128xf32>
    %5 = arith.addf %3, %4 : vector<2x128xf32>
    %cst_4 = arith.constant 0.000000e+00 : f32
    %6 = vector.broadcast %cst_4 : f32 to vector<2x128xf32>
    %7 = arith.maximumf %5, %6 : vector<2x128xf32>
    %c0_5 = arith.constant 0 : index
    %c0_6 = arith.constant 0 : index
    %c0_7 = arith.constant 0 : index
    %8 = vector.load %arg1[%c0_5, %c0_6, %c0_7] : memref<8x2x16xf32, #tpu.memory_space<vmem>>, vector<8x2x16xf32>
    %9 = vector.shape_cast %8 : vector<8x2x16xf32> to vector<16x16xf32>
    %c0_8 = arith.constant 0 : index
    %c0_9 = arith.constant 0 : index
    %10 = vector.load %arg2[%c0_8, %c0_9] : memref<128x128xf32, #tpu.memory_space<vmem>>, vector<16x128xf32>
    %c16 = arith.constant 16 : index
    %c0_10 = arith.constant 0 : index
    %11 = vector.load %arg2[%c16, %c0_10] : memref<128x128xf32, #tpu.memory_space<vmem>>, vector<32x128xf32>
    %c48 = arith.constant 48 : index
    %c0_11 = arith.constant 0 : index
    %12 = vector.load %arg2[%c48, %c0_11] : memref<128x128xf32, #tpu.memory_space<vmem>>, vector<1x128xf32>
    %cst_12 = arith.constant dense<0.000000e+00> : vector<16x128xf32>
    %13 = tpu.matmul %9, %10, %cst_12 {dimension_numbers = #tpu.dot_dimension_numbers<[1], [0], [0], [1], [0, 0, 1, 1], [], []>} : vector<16x16xf32>, vector<16x128xf32>, vector<16x128xf32> -> vector<16x128xf32>
    %14 = vector.broadcast %12 : vector<1x128xf32> to vector<16x128xf32>
    %15 = arith.addf %13, %14 : vector<16x128xf32>
    %cst_13 = arith.constant 0.000000e+00 : f32
    %16 = vector.broadcast %cst_13 : f32 to vector<2x32xf32>
    %cst_14 = arith.constant 0.000000e+00 : f32
    %17 = vector.broadcast %cst_14 : f32 to vector<2x32xf32>
    %18 = vector.extract_strided_slice %15 {offsets = [0, 0], sizes = [2, 128], strides = [1, 1]} : vector<16x128xf32> to vector<2x128xf32>
    %cst_15 = arith.constant dense<0.000000e+00> : vector<2x128xf32>
    %19 = tpu.matmul %16, %11, %cst_15 {dimension_numbers = #tpu.dot_dimension_numbers<[1], [0], [0], [1], [0, 0, 1, 1], [], []>} : vector<2x32xf32>, vector<32x128xf32>, vector<2x128xf32> -> vector<2x128xf32>
    %20 = arith.addf %18, %19 : vector<2x128xf32>
    %21 = arith.negf %20 : vector<2x128xf32>
    %22 = math.exp %21 : vector<2x128xf32>
    %cst_16 = arith.constant 1.000000e+00 : f32
    %23 = vector.broadcast %cst_16 : f32 to vector<2x128xf32>
    %24 = arith.addf %23, %22 : vector<2x128xf32>
    %25 = arith.divf %23, %24 : vector<2x128xf32>
    %26 = vector.extract_strided_slice %25 {offsets = [0, 0], sizes = [2, 32], strides = [1, 1]} : vector<2x128xf32> to vector<2x32xf32>
    %27 = vector.extract_strided_slice %25 {offsets = [0, 32], sizes = [2, 32], strides = [1, 1]} : vector<2x128xf32> to vector<2x32xf32>
    %28 = vector.extract_strided_slice %25 {offsets = [0, 96], sizes = [2, 32], strides = [1, 1]} : vector<2x128xf32> to vector<2x32xf32>
    %29 = vector.extract_strided_slice %20 {offsets = [0, 64], sizes = [2, 32], strides = [1, 1]} : vector<2x128xf32> to vector<2x32xf32>
    %30 = math.tanh %29 : vector<2x32xf32>
    %31 = arith.mulf %27, %17 : vector<2x32xf32>
    %32 = arith.mulf %26, %30 : vector<2x32xf32>
    %33 = arith.addf %31, %32 : vector<2x32xf32>
    %34 = math.tanh %33 : vector<2x32xf32>
    %35 = arith.mulf %28, %34 : vector<2x32xf32>
    %c0_17 = arith.constant 0 : index
    %c0_18 = arith.constant 0 : index
    %c0_19 = arith.constant 0 : index
    %36 = vector.load %arg5[%c0_17, %c0_18, %c0_19] : memref<8x2x32xf32, #tpu.memory_space<vmem>>, vector<1x2x32xf32>
    %37 = vector.shape_cast %36 : vector<1x2x32xf32> to vector<2x32xf32>
    %38 = vector.shape_cast %35 : vector<2x32xf32> to vector<1x2x32xf32>
    tpu.vector_store %arg5[%c0_17, %c0_18, %c0_19], %38 {strides = array<i32>} : memref<8x2x32xf32, #tpu.memory_space<vmem>>, vector<1x2x32xf32>,
    %39 = vector.extract_strided_slice %15 {offsets = [2, 0], sizes = [2, 128], strides = [1, 1]} : vector<16x128xf32> to vector<2x128xf32>
    %cst_20 = arith.constant dense<0.000000e+00> : vector<2x128xf32>
    %40 = tpu.matmul %35, %11, %cst_20 {dimension_numbers = #tpu.dot_dimension_numbers<[1], [0], [0], [1], [0, 0, 1, 1], [], []>} : vector<2x32xf32>, vector<32x128xf32>, vector<2x128xf32> -> vector<2x128xf32>
    %41 = arith.addf %39, %40 : vector<2x128xf32>
    %42 = arith.negf %41 : vector<2x128xf32>
    %43 = math.exp %42 : vector<2x128xf32>
    %cst_21 = arith.constant 1.000000e+00 : f32
    %44 = vector.broadcast %cst_21 : f32 to vector<2x128xf32>
    %45 = arith.addf %44, %43 : vector<2x128xf32>
    %46 = arith.divf %44, %45 : vector<2x128xf32>
    %47 = vector.extract_strided_slice %46 {offsets = [0, 0], sizes = [2, 32], strides = [1, 1]} : vector<2x128xf32> to vector<2x32xf32>
    %48 = vector.extract_strided_slice %46 {offsets = [0, 32], sizes = [2, 32], strides = [1, 1]} : vector<2x128xf32> to vector<2x32xf32>
    %49 = vector.extract_strided_slice %46 {offsets = [0, 96], sizes = [2, 32], strides = [1, 1]} : vector<2x128xf32> to vector<2x32xf32>
    %50 = vector.extract_strided_slice %41 {offsets = [0, 64], sizes = [2, 32], strides = [1, 1]} : vector<2x128xf32> to vector<2x32xf32>
    %51 = math.tanh %50 : vector<2x32xf32>
    %52 = arith.mulf %48, %33 : vector<2x32xf32>
    %53 = arith.mulf %47, %51 : vector<2x32xf32>
    %54 = arith.addf %52, %53 : vector<2x32xf32>
    %55 = math.tanh %54 : vector<2x32xf32>
    %56 = arith.mulf %49, %55 : vector<2x32xf32>
    %c1 = arith.constant 1 : index
    %c0_22 = arith.constant 0 : index
    %c0_23 = arith.constant 0 : index
    %57 = vector.load %arg5[%c1, %c0_22, %c0_23] : memref<8x2x32xf32, #tpu.memory_space<vmem>>, vector<1x2x32xf32>
    %58 = vector.shape_cast %57 : vector<1x2x32xf32> to vector<2x32xf32>
    %59 = vector.shape_cast %56 : vector<2x32xf32> to vector<1x2x32xf32>
    tpu.vector_store %arg5[%c1, %c0_22, %c0_23], %59 {strides = array<i32>} : memref<8x2x32xf32, #tpu.memory_space<vmem>>, vector<1x2x32xf32>,
    %60 = vector.extract_strided_slice %15 {offsets = [4, 0], sizes = [2, 128], strides = [1, 1]} : vector<16x128xf32> to vector<2x128xf32>
    %cst_24 = arith.constant dense<0.000000e+00> : vector<2x128xf32>
    %61 = tpu.matmul %56, %11, %cst_24 {dimension_numbers = #tpu.dot_dimension_numbers<[1], [0], [0], [1], [0, 0, 1, 1], [], []>} : vector<2x32xf32>, vector<32x128xf32>, vector<2x128xf32> -> vector<2x128xf32>
    %62 = arith.addf %60, %61 : vector<2x128xf32>
    %63 = arith.negf %62 : vector<2x128xf32>
    %64 = math.exp %63 : vector<2x128xf32>
    %cst_25 = arith.constant 1.000000e+00 : f32
    %65 = vector.broadcast %cst_25 : f32 to vector<2x128xf32>
    %66 = arith.addf %65, %64 : vector<2x128xf32>
    %67 = arith.divf %65, %66 : vector<2x128xf32>
    %68 = vector.extract_strided_slice %67 {offsets = [0, 0], sizes = [2, 32], strides = [1, 1]} : vector<2x128xf32> to vector<2x32xf32>
    %69 = vector.extract_strided_slice %67 {offsets = [0, 32], sizes = [2, 32], strides = [1, 1]} : vector<2x128xf32> to vector<2x32xf32>
    %70 = vector.extract_strided_slice %67 {offsets = [0, 96], sizes = [2, 32], strides = [1, 1]} : vector<2x128xf32> to vector<2x32xf32>
    %71 = vector.extract_strided_slice %62 {offsets = [0, 64], sizes = [2, 32], strides = [1, 1]} : vector<2x128xf32> to vector<2x32xf32>
    %72 = math.tanh %71 : vector<2x32xf32>
    %73 = arith.mulf %69, %54 : vector<2x32xf32>
    %74 = arith.mulf %68, %72 : vector<2x32xf32>
    %75 = arith.addf %73, %74 : vector<2x32xf32>
    %76 = math.tanh %75 : vector<2x32xf32>
    %77 = arith.mulf %70, %76 : vector<2x32xf32>
    %c2 = arith.constant 2 : index
    %c0_26 = arith.constant 0 : index
    %c0_27 = arith.constant 0 : index
    %78 = vector.load %arg5[%c2, %c0_26, %c0_27] : memref<8x2x32xf32, #tpu.memory_space<vmem>>, vector<1x2x32xf32>
    %79 = vector.shape_cast %78 : vector<1x2x32xf32> to vector<2x32xf32>
    %80 = vector.shape_cast %77 : vector<2x32xf32> to vector<1x2x32xf32>
    tpu.vector_store %arg5[%c2, %c0_26, %c0_27], %80 {strides = array<i32>} : memref<8x2x32xf32, #tpu.memory_space<vmem>>, vector<1x2x32xf32>,
    %81 = vector.extract_strided_slice %15 {offsets = [6, 0], sizes = [2, 128], strides = [1, 1]} : vector<16x128xf32> to vector<2x128xf32>
    %cst_28 = arith.constant dense<0.000000e+00> : vector<2x128xf32>
    %82 = tpu.matmul %77, %11, %cst_28 {dimension_numbers = #tpu.dot_dimension_numbers<[1], [0], [0], [1], [0, 0, 1, 1], [], []>} : vector<2x32xf32>, vector<32x128xf32>, vector<2x128xf32> -> vector<2x128xf32>
    %83 = arith.addf %81, %82 : vector<2x128xf32>
    %84 = arith.negf %83 : vector<2x128xf32>
    %85 = math.exp %84 : vector<2x128xf32>
    %cst_29 = arith.constant 1.000000e+00 : f32
    %86 = vector.broadcast %cst_29 : f32 to vector<2x128xf32>
    %87 = arith.addf %86, %85 : vector<2x128xf32>
    %88 = arith.divf %86, %87 : vector<2x128xf32>
    %89 = vector.extract_strided_slice %88 {offsets = [0, 0], sizes = [2, 32], strides = [1, 1]} : vector<2x128xf32> to vector<2x32xf32>
    %90 = vector.extract_strided_slice %88 {offsets = [0, 32], sizes = [2, 32], strides = [1, 1]} : vector<2x128xf32> to vector<2x32xf32>
    %91 = vector.extract_strided_slice %88 {offsets = [0, 96], sizes = [2, 32], strides = [1, 1]} : vector<2x128xf32> to vector<2x32xf32>
    %92 = vector.extract_strided_slice %83 {offsets = [0, 64], sizes = [2, 32], strides = [1, 1]} : vector<2x128xf32> to vector<2x32xf32>
    %93 = math.tanh %92 : vector<2x32xf32>
    %94 = arith.mulf %90, %75 : vector<2x32xf32>
    %95 = arith.mulf %89, %93 : vector<2x32xf32>
    %96 = arith.addf %94, %95 : vector<2x32xf32>
    %97 = math.tanh %96 : vector<2x32xf32>
    %98 = arith.mulf %91, %97 : vector<2x32xf32>
    %c3 = arith.constant 3 : index
    %c0_30 = arith.constant 0 : index
    %c0_31 = arith.constant 0 : index
    %99 = vector.load %arg5[%c3, %c0_30, %c0_31] : memref<8x2x32xf32, #tpu.memory_space<vmem>>, vector<1x2x32xf32>
    %100 = vector.shape_cast %99 : vector<1x2x32xf32> to vector<2x32xf32>
    %101 = vector.shape_cast %98 : vector<2x32xf32> to vector<1x2x32xf32>
    tpu.vector_store %arg5[%c3, %c0_30, %c0_31], %101 {strides = array<i32>} : memref<8x2x32xf32, #tpu.memory_space<vmem>>, vector<1x2x32xf32>,
    %102 = vector.extract_strided_slice %15 {offsets = [8, 0], sizes = [2, 128], strides = [1, 1]} : vector<16x128xf32> to vector<2x128xf32>
    %cst_32 = arith.constant dense<0.000000e+00> : vector<2x128xf32>
    %103 = tpu.matmul %98, %11, %cst_32 {dimension_numbers = #tpu.dot_dimension_numbers<[1], [0], [0], [1], [0, 0, 1, 1], [], []>} : vector<2x32xf32>, vector<32x128xf32>, vector<2x128xf32> -> vector<2x128xf32>
    %104 = arith.addf %102, %103 : vector<2x128xf32>
    %105 = arith.negf %104 : vector<2x128xf32>
    %106 = math.exp %105 : vector<2x128xf32>
    %cst_33 = arith.constant 1.000000e+00 : f32
    %107 = vector.broadcast %cst_33 : f32 to vector<2x128xf32>
    %108 = arith.addf %107, %106 : vector<2x128xf32>
    %109 = arith.divf %107, %108 : vector<2x128xf32>
    %110 = vector.extract_strided_slice %109 {offsets = [0, 0], sizes = [2, 32], strides = [1, 1]} : vector<2x128xf32> to vector<2x32xf32>
    %111 = vector.extract_strided_slice %109 {offsets = [0, 32], sizes = [2, 32], strides = [1, 1]} : vector<2x128xf32> to vector<2x32xf32>
    %112 = vector.extract_strided_slice %109 {offsets = [0, 96], sizes = [2, 32], strides = [1, 1]} : vector<2x128xf32> to vector<2x32xf32>
    %113 = vector.extract_strided_slice %104 {offsets = [0, 64], sizes = [2, 32], strides = [1, 1]} : vector<2x128xf32> to vector<2x32xf32>
    %114 = math.tanh %113 : vector<2x32xf32>
    %115 = arith.mulf %111, %96 : vector<2x32xf32>
    %116 = arith.mulf %110, %114 : vector<2x32xf32>
    %117 = arith.addf %115, %116 : vector<2x32xf32>
    %118 = math.tanh %117 : vector<2x32xf32>
    %119 = arith.mulf %112, %118 : vector<2x32xf32>
    %c4 = arith.constant 4 : index
    %c0_34 = arith.constant 0 : index
    %c0_35 = arith.constant 0 : index
    %120 = vector.load %arg5[%c4, %c0_34, %c0_35] : memref<8x2x32xf32, #tpu.memory_space<vmem>>, vector<1x2x32xf32>
    %121 = vector.shape_cast %120 : vector<1x2x32xf32> to vector<2x32xf32>
    %122 = vector.shape_cast %119 : vector<2x32xf32> to vector<1x2x32xf32>
    tpu.vector_store %arg5[%c4, %c0_34, %c0_35], %122 {strides = array<i32>} : memref<8x2x32xf32, #tpu.memory_space<vmem>>, vector<1x2x32xf32>,
    %123 = vector.extract_strided_slice %15 {offsets = [10, 0], sizes = [2, 128], strides = [1, 1]} : vector<16x128xf32> to vector<2x128xf32>
    %cst_36 = arith.constant dense<0.000000e+00> : vector<2x128xf32>
    %124 = tpu.matmul %119, %11, %cst_36 {dimension_numbers = #tpu.dot_dimension_numbers<[1], [0], [0], [1], [0, 0, 1, 1], [], []>} : vector<2x32xf32>, vector<32x128xf32>, vector<2x128xf32> -> vector<2x128xf32>
    %125 = arith.addf %123, %124 : vector<2x128xf32>
    %126 = arith.negf %125 : vector<2x128xf32>
    %127 = math.exp %126 : vector<2x128xf32>
    %cst_37 = arith.constant 1.000000e+00 : f32
    %128 = vector.broadcast %cst_37 : f32 to vector<2x128xf32>
    %129 = arith.addf %128, %127 : vector<2x128xf32>
    %130 = arith.divf %128, %129 : vector<2x128xf32>
    %131 = vector.extract_strided_slice %130 {offsets = [0, 0], sizes = [2, 32], strides = [1, 1]} : vector<2x128xf32> to vector<2x32xf32>
    %132 = vector.extract_strided_slice %130 {offsets = [0, 32], sizes = [2, 32], strides = [1, 1]} : vector<2x128xf32> to vector<2x32xf32>
    %133 = vector.extract_strided_slice %130 {offsets = [0, 96], sizes = [2, 32], strides = [1, 1]} : vector<2x128xf32> to vector<2x32xf32>
    %134 = vector.extract_strided_slice %125 {offsets = [0, 64], sizes = [2, 32], strides = [1, 1]} : vector<2x128xf32> to vector<2x32xf32>
    %135 = math.tanh %134 : vector<2x32xf32>
    %136 = arith.mulf %132, %117 : vector<2x32xf32>
    %137 = arith.mulf %131, %135 : vector<2x32xf32>
    %138 = arith.addf %136, %137 : vector<2x32xf32>
    %139 = math.tanh %138 : vector<2x32xf32>
    %140 = arith.mulf %133, %139 : vector<2x32xf32>
    %c5 = arith.constant 5 : index
    %c0_38 = arith.constant 0 : index
    %c0_39 = arith.constant 0 : index
    %141 = vector.load %arg5[%c5, %c0_38, %c0_39] : memref<8x2x32xf32, #tpu.memory_space<vmem>>, vector<1x2x32xf32>
    %142 = vector.shape_cast %141 : vector<1x2x32xf32> to vector<2x32xf32>
    %143 = vector.shape_cast %140 : vector<2x32xf32> to vector<1x2x32xf32>
    tpu.vector_store %arg5[%c5, %c0_38, %c0_39], %143 {strides = array<i32>} : memref<8x2x32xf32, #tpu.memory_space<vmem>>, vector<1x2x32xf32>,
    %144 = vector.extract_strided_slice %15 {offsets = [12, 0], sizes = [2, 128], strides = [1, 1]} : vector<16x128xf32> to vector<2x128xf32>
    %cst_40 = arith.constant dense<0.000000e+00> : vector<2x128xf32>
    %145 = tpu.matmul %140, %11, %cst_40 {dimension_numbers = #tpu.dot_dimension_numbers<[1], [0], [0], [1], [0, 0, 1, 1], [], []>} : vector<2x32xf32>, vector<32x128xf32>, vector<2x128xf32> -> vector<2x128xf32>
    %146 = arith.addf %144, %145 : vector<2x128xf32>
    %147 = arith.negf %146 : vector<2x128xf32>
    %148 = math.exp %147 : vector<2x128xf32>
    %cst_41 = arith.constant 1.000000e+00 : f32
    %149 = vector.broadcast %cst_41 : f32 to vector<2x128xf32>
    %150 = arith.addf %149, %148 : vector<2x128xf32>
    %151 = arith.divf %149, %150 : vector<2x128xf32>
    %152 = vector.extract_strided_slice %151 {offsets = [0, 0], sizes = [2, 32], strides = [1, 1]} : vector<2x128xf32> to vector<2x32xf32>
    %153 = vector.extract_strided_slice %151 {offsets = [0, 32], sizes = [2, 32], strides = [1, 1]} : vector<2x128xf32> to vector<2x32xf32>
    %154 = vector.extract_strided_slice %151 {offsets = [0, 96], sizes = [2, 32], strides = [1, 1]} : vector<2x128xf32> to vector<2x32xf32>
    %155 = vector.extract_strided_slice %146 {offsets = [0, 64], sizes = [2, 32], strides = [1, 1]} : vector<2x128xf32> to vector<2x32xf32>
    %156 = math.tanh %155 : vector<2x32xf32>
    %157 = arith.mulf %153, %138 : vector<2x32xf32>
    %158 = arith.mulf %152, %156 : vector<2x32xf32>
    %159 = arith.addf %157, %158 : vector<2x32xf32>
    %160 = math.tanh %159 : vector<2x32xf32>
    %161 = arith.mulf %154, %160 : vector<2x32xf32>
    %c6 = arith.constant 6 : index
    %c0_42 = arith.constant 0 : index
    %c0_43 = arith.constant 0 : index
    %162 = vector.load %arg5[%c6, %c0_42, %c0_43] : memref<8x2x32xf32, #tpu.memory_space<vmem>>, vector<1x2x32xf32>
    %163 = vector.shape_cast %162 : vector<1x2x32xf32> to vector<2x32xf32>
    %164 = vector.shape_cast %161 : vector<2x32xf32> to vector<1x2x32xf32>
    tpu.vector_store %arg5[%c6, %c0_42, %c0_43], %164 {strides = array<i32>} : memref<8x2x32xf32, #tpu.memory_space<vmem>>, vector<1x2x32xf32>,
    %165 = vector.extract_strided_slice %15 {offsets = [14, 0], sizes = [2, 128], strides = [1, 1]} : vector<16x128xf32> to vector<2x128xf32>
    %cst_44 = arith.constant dense<0.000000e+00> : vector<2x128xf32>
    %166 = tpu.matmul %161, %11, %cst_44 {dimension_numbers = #tpu.dot_dimension_numbers<[1], [0], [0], [1], [0, 0, 1, 1], [], []>} : vector<2x32xf32>, vector<32x128xf32>, vector<2x128xf32> -> vector<2x128xf32>
    %167 = arith.addf %165, %166 : vector<2x128xf32>
    %168 = arith.negf %167 : vector<2x128xf32>
    %169 = math.exp %168 : vector<2x128xf32>
    %cst_45 = arith.constant 1.000000e+00 : f32
    %170 = vector.broadcast %cst_45 : f32 to vector<2x128xf32>
    %171 = arith.addf %170, %169 : vector<2x128xf32>
    %172 = arith.divf %170, %171 : vector<2x128xf32>
    %173 = vector.extract_strided_slice %172 {offsets = [0, 0], sizes = [2, 32], strides = [1, 1]} : vector<2x128xf32> to vector<2x32xf32>
    %174 = vector.extract_strided_slice %172 {offsets = [0, 32], sizes = [2, 32], strides = [1, 1]} : vector<2x128xf32> to vector<2x32xf32>
    %175 = vector.extract_strided_slice %172 {offsets = [0, 96], sizes = [2, 32], strides = [1, 1]} : vector<2x128xf32> to vector<2x32xf32>
    %176 = vector.extract_strided_slice %167 {offsets = [0, 64], sizes = [2, 32], strides = [1, 1]} : vector<2x128xf32> to vector<2x32xf32>
    %177 = math.tanh %176 : vector<2x32xf32>
    %178 = arith.mulf %174, %159 : vector<2x32xf32>
    %179 = arith.mulf %173, %177 : vector<2x32xf32>
    %180 = arith.addf %178, %179 : vector<2x32xf32>
    %181 = math.tanh %180 : vector<2x32xf32>
    %182 = arith.mulf %175, %181 : vector<2x32xf32>
    %c7 = arith.constant 7 : index
    %c0_46 = arith.constant 0 : index
    %c0_47 = arith.constant 0 : index
    %183 = vector.load %arg5[%c7, %c0_46, %c0_47] : memref<8x2x32xf32, #tpu.memory_space<vmem>>, vector<1x2x32xf32>
    %184 = vector.shape_cast %183 : vector<1x2x32xf32> to vector<2x32xf32>
    %185 = vector.shape_cast %182 : vector<2x32xf32> to vector<1x2x32xf32>
    tpu.vector_store %arg5[%c7, %c0_46, %c0_47], %185 {strides = array<i32>} : memref<8x2x32xf32, #tpu.memory_space<vmem>>, vector<1x2x32xf32>,
    %c0_48 = arith.constant 0 : index
    %c0_49 = arith.constant 0 : index
    %c0_50 = arith.constant 0 : index
    %186 = vector.load %arg5[%c0_48, %c0_49, %c0_50] : memref<8x2x32xf32, #tpu.memory_space<vmem>>, vector<8x2x32xf32>
    %187 = vector.shape_cast %186 : vector<8x2x32xf32> to vector<16x32xf32>
    %c56 = arith.constant 56 : index
    %c0_51 = arith.constant 0 : index
    %188 = vector.load %arg2[%c56, %c0_51] : memref<128x128xf32, #tpu.memory_space<vmem>>, vector<32x128xf32>
    %c88 = arith.constant 88 : index
    %c0_52 = arith.constant 0 : index
    %189 = vector.load %arg2[%c88, %c0_52] : memref<128x128xf32, #tpu.memory_space<vmem>>, vector<32x128xf32>
    %c120 = arith.constant 120 : index
    %c0_53 = arith.constant 0 : index
    %190 = vector.load %arg2[%c120, %c0_53] : memref<128x128xf32, #tpu.memory_space<vmem>>, vector<1x128xf32>
    %cst_54 = arith.constant dense<0.000000e+00> : vector<16x128xf32>
    %191 = tpu.matmul %187, %188, %cst_54 {dimension_numbers = #tpu.dot_dimension_numbers<[1], [0], [0], [1], [0, 0, 1, 1], [], []>} : vector<16x32xf32>, vector<32x128xf32>, vector<16x128xf32> -> vector<16x128xf32>
    %192 = vector.broadcast %190 : vector<1x128xf32> to vector<16x128xf32>
    %193 = arith.addf %191, %192 : vector<16x128xf32>
    %cst_55 = arith.constant 0.000000e+00 : f32
    %194 = vector.broadcast %cst_55 : f32 to vector<2x32xf32>
    %cst_56 = arith.constant 0.000000e+00 : f32
    %195 = vector.broadcast %cst_56 : f32 to vector<2x32xf32>
    %196 = vector.extract_strided_slice %193 {offsets = [0, 0], sizes = [2, 128], strides = [1, 1]} : vector<16x128xf32> to vector<2x128xf32>
    %cst_57 = arith.constant dense<0.000000e+00> : vector<2x128xf32>
    %197 = tpu.matmul %194, %189, %cst_57 {dimension_numbers = #tpu.dot_dimension_numbers<[1], [0], [0], [1], [0, 0, 1, 1], [], []>} : vector<2x32xf32>, vector<32x128xf32>, vector<2x128xf32> -> vector<2x128xf32>
    %198 = arith.addf %196, %197 : vector<2x128xf32>
    %199 = arith.negf %198 : vector<2x128xf32>
    %200 = math.exp %199 : vector<2x128xf32>
    %cst_58 = arith.constant 1.000000e+00 : f32
    %201 = vector.broadcast %cst_58 : f32 to vector<2x128xf32>
    %202 = arith.addf %201, %200 : vector<2x128xf32>
    %203 = arith.divf %201, %202 : vector<2x128xf32>
    %204 = vector.extract_strided_slice %203 {offsets = [0, 0], sizes = [2, 32], strides = [1, 1]} : vector<2x128xf32> to vector<2x32xf32>
    %205 = vector.extract_strided_slice %203 {offsets = [0, 32], sizes = [2, 32], strides = [1, 1]} : vector<2x128xf32> to vector<2x32xf32>
    %206 = vector.extract_strided_slice %203 {offsets = [0, 96], sizes = [2, 32], strides = [1, 1]} : vector<2x128xf32> to vector<2x32xf32>
    %207 = vector.extract_strided_slice %198 {offsets = [0, 64], sizes = [2, 32], strides = [1, 1]} : vector<2x128xf32> to vector<2x32xf32>
    %208 = math.tanh %207 : vector<2x32xf32>
    %209 = arith.mulf %205, %195 : vector<2x32xf32>
    %210 = arith.mulf %204, %208 : vector<2x32xf32>
    %211 = arith.addf %209, %210 : vector<2x32xf32>
    %212 = math.tanh %211 : vector<2x32xf32>
    %213 = arith.mulf %206, %212 : vector<2x32xf32>
    %c0_59 = arith.constant 0 : index
    %c0_60 = arith.constant 0 : index
    %c0_61 = arith.constant 0 : index
    %214 = vector.load %arg5[%c0_59, %c0_60, %c0_61] : memref<8x2x32xf32, #tpu.memory_space<vmem>>, vector<1x2x32xf32>
    %215 = vector.shape_cast %214 : vector<1x2x32xf32> to vector<2x32xf32>
    %216 = vector.shape_cast %213 : vector<2x32xf32> to vector<1x2x32xf32>
    tpu.vector_store %arg5[%c0_59, %c0_60, %c0_61], %216 {strides = array<i32>} : memref<8x2x32xf32, #tpu.memory_space<vmem>>, vector<1x2x32xf32>,
    %217 = vector.extract_strided_slice %193 {offsets = [2, 0], sizes = [2, 128], strides = [1, 1]} : vector<16x128xf32> to vector<2x128xf32>
    %cst_62 = arith.constant dense<0.000000e+00> : vector<2x128xf32>
    %218 = tpu.matmul %213, %189, %cst_62 {dimension_numbers = #tpu.dot_dimension_numbers<[1], [0], [0], [1], [0, 0, 1, 1], [], []>} : vector<2x32xf32>, vector<32x128xf32>, vector<2x128xf32> -> vector<2x128xf32>
    %219 = arith.addf %217, %218 : vector<2x128xf32>
    %220 = arith.negf %219 : vector<2x128xf32>
    %221 = math.exp %220 : vector<2x128xf32>
    %cst_63 = arith.constant 1.000000e+00 : f32
    %222 = vector.broadcast %cst_63 : f32 to vector<2x128xf32>
    %223 = arith.addf %222, %221 : vector<2x128xf32>
    %224 = arith.divf %222, %223 : vector<2x128xf32>
    %225 = vector.extract_strided_slice %224 {offsets = [0, 0], sizes = [2, 32], strides = [1, 1]} : vector<2x128xf32> to vector<2x32xf32>
    %226 = vector.extract_strided_slice %224 {offsets = [0, 32], sizes = [2, 32], strides = [1, 1]} : vector<2x128xf32> to vector<2x32xf32>
    %227 = vector.extract_strided_slice %224 {offsets = [0, 96], sizes = [2, 32], strides = [1, 1]} : vector<2x128xf32> to vector<2x32xf32>
    %228 = vector.extract_strided_slice %219 {offsets = [0, 64], sizes = [2, 32], strides = [1, 1]} : vector<2x128xf32> to vector<2x32xf32>
    %229 = math.tanh %228 : vector<2x32xf32>
    %230 = arith.mulf %226, %211 : vector<2x32xf32>
    %231 = arith.mulf %225, %229 : vector<2x32xf32>
    %232 = arith.addf %230, %231 : vector<2x32xf32>
    %233 = math.tanh %232 : vector<2x32xf32>
    %234 = arith.mulf %227, %233 : vector<2x32xf32>
    %c1_64 = arith.constant 1 : index
    %c0_65 = arith.constant 0 : index
    %c0_66 = arith.constant 0 : index
    %235 = vector.load %arg5[%c1_64, %c0_65, %c0_66] : memref<8x2x32xf32, #tpu.memory_space<vmem>>, vector<1x2x32xf32>
    %236 = vector.shape_cast %235 : vector<1x2x32xf32> to vector<2x32xf32>
    %237 = vector.shape_cast %234 : vector<2x32xf32> to vector<1x2x32xf32>
    tpu.vector_store %arg5[%c1_64, %c0_65, %c0_66], %237 {strides = array<i32>} : memref<8x2x32xf32, #tpu.memory_space<vmem>>, vector<1x2x32xf32>,
    %238 = vector.extract_strided_slice %193 {offsets = [4, 0], sizes = [2, 128], strides = [1, 1]} : vector<16x128xf32> to vector<2x128xf32>
    %cst_67 = arith.constant dense<0.000000e+00> : vector<2x128xf32>
    %239 = tpu.matmul %234, %189, %cst_67 {dimension_numbers = #tpu.dot_dimension_numbers<[1], [0], [0], [1], [0, 0, 1, 1], [], []>} : vector<2x32xf32>, vector<32x128xf32>, vector<2x128xf32> -> vector<2x128xf32>
    %240 = arith.addf %238, %239 : vector<2x128xf32>
    %241 = arith.negf %240 : vector<2x128xf32>
    %242 = math.exp %241 : vector<2x128xf32>
    %cst_68 = arith.constant 1.000000e+00 : f32
    %243 = vector.broadcast %cst_68 : f32 to vector<2x128xf32>
    %244 = arith.addf %243, %242 : vector<2x128xf32>
    %245 = arith.divf %243, %244 : vector<2x128xf32>
    %246 = vector.extract_strided_slice %245 {offsets = [0, 0], sizes = [2, 32], strides = [1, 1]} : vector<2x128xf32> to vector<2x32xf32>
    %247 = vector.extract_strided_slice %245 {offsets = [0, 32], sizes = [2, 32], strides = [1, 1]} : vector<2x128xf32> to vector<2x32xf32>
    %248 = vector.extract_strided_slice %245 {offsets = [0, 96], sizes = [2, 32], strides = [1, 1]} : vector<2x128xf32> to vector<2x32xf32>
    %249 = vector.extract_strided_slice %240 {offsets = [0, 64], sizes = [2, 32], strides = [1, 1]} : vector<2x128xf32> to vector<2x32xf32>
    %250 = math.tanh %249 : vector<2x32xf32>
    %251 = arith.mulf %247, %232 : vector<2x32xf32>
    %252 = arith.mulf %246, %250 : vector<2x32xf32>
    %253 = arith.addf %251, %252 : vector<2x32xf32>
    %254 = math.tanh %253 : vector<2x32xf32>
    %255 = arith.mulf %248, %254 : vector<2x32xf32>
    %c2_69 = arith.constant 2 : index
    %c0_70 = arith.constant 0 : index
    %c0_71 = arith.constant 0 : index
    %256 = vector.load %arg5[%c2_69, %c0_70, %c0_71] : memref<8x2x32xf32, #tpu.memory_space<vmem>>, vector<1x2x32xf32>
    %257 = vector.shape_cast %256 : vector<1x2x32xf32> to vector<2x32xf32>
    %258 = vector.shape_cast %255 : vector<2x32xf32> to vector<1x2x32xf32>
    tpu.vector_store %arg5[%c2_69, %c0_70, %c0_71], %258 {strides = array<i32>} : memref<8x2x32xf32, #tpu.memory_space<vmem>>, vector<1x2x32xf32>,
    %259 = vector.extract_strided_slice %193 {offsets = [6, 0], sizes = [2, 128], strides = [1, 1]} : vector<16x128xf32> to vector<2x128xf32>
    %cst_72 = arith.constant dense<0.000000e+00> : vector<2x128xf32>
    %260 = tpu.matmul %255, %189, %cst_72 {dimension_numbers = #tpu.dot_dimension_numbers<[1], [0], [0], [1], [0, 0, 1, 1], [], []>} : vector<2x32xf32>, vector<32x128xf32>, vector<2x128xf32> -> vector<2x128xf32>
    %261 = arith.addf %259, %260 : vector<2x128xf32>
    %262 = arith.negf %261 : vector<2x128xf32>
    %263 = math.exp %262 : vector<2x128xf32>
    %cst_73 = arith.constant 1.000000e+00 : f32
    %264 = vector.broadcast %cst_73 : f32 to vector<2x128xf32>
    %265 = arith.addf %264, %263 : vector<2x128xf32>
    %266 = arith.divf %264, %265 : vector<2x128xf32>
    %267 = vector.extract_strided_slice %266 {offsets = [0, 0], sizes = [2, 32], strides = [1, 1]} : vector<2x128xf32> to vector<2x32xf32>
    %268 = vector.extract_strided_slice %266 {offsets = [0, 32], sizes = [2, 32], strides = [1, 1]} : vector<2x128xf32> to vector<2x32xf32>
    %269 = vector.extract_strided_slice %266 {offsets = [0, 96], sizes = [2, 32], strides = [1, 1]} : vector<2x128xf32> to vector<2x32xf32>
    %270 = vector.extract_strided_slice %261 {offsets = [0, 64], sizes = [2, 32], strides = [1, 1]} : vector<2x128xf32> to vector<2x32xf32>
    %271 = math.tanh %270 : vector<2x32xf32>
    %272 = arith.mulf %268, %253 : vector<2x32xf32>
    %273 = arith.mulf %267, %271 : vector<2x32xf32>
    %274 = arith.addf %272, %273 : vector<2x32xf32>
    %275 = math.tanh %274 : vector<2x32xf32>
    %276 = arith.mulf %269, %275 : vector<2x32xf32>
    %c3_74 = arith.constant 3 : index
    %c0_75 = arith.constant 0 : index
    %c0_76 = arith.constant 0 : index
    %277 = vector.load %arg5[%c3_74, %c0_75, %c0_76] : memref<8x2x32xf32, #tpu.memory_space<vmem>>, vector<1x2x32xf32>
    %278 = vector.shape_cast %277 : vector<1x2x32xf32> to vector<2x32xf32>
    %279 = vector.shape_cast %276 : vector<2x32xf32> to vector<1x2x32xf32>
    tpu.vector_store %arg5[%c3_74, %c0_75, %c0_76], %279 {strides = array<i32>} : memref<8x2x32xf32, #tpu.memory_space<vmem>>, vector<1x2x32xf32>,
    %280 = vector.extract_strided_slice %193 {offsets = [8, 0], sizes = [2, 128], strides = [1, 1]} : vector<16x128xf32> to vector<2x128xf32>
    %cst_77 = arith.constant dense<0.000000e+00> : vector<2x128xf32>
    %281 = tpu.matmul %276, %189, %cst_77 {dimension_numbers = #tpu.dot_dimension_numbers<[1], [0], [0], [1], [0, 0, 1, 1], [], []>} : vector<2x32xf32>, vector<32x128xf32>, vector<2x128xf32> -> vector<2x128xf32>
    %282 = arith.addf %280, %281 : vector<2x128xf32>
    %283 = arith.negf %282 : vector<2x128xf32>
    %284 = math.exp %283 : vector<2x128xf32>
    %cst_78 = arith.constant 1.000000e+00 : f32
    %285 = vector.broadcast %cst_78 : f32 to vector<2x128xf32>
    %286 = arith.addf %285, %284 : vector<2x128xf32>
    %287 = arith.divf %285, %286 : vector<2x128xf32>
    %288 = vector.extract_strided_slice %287 {offsets = [0, 0], sizes = [2, 32], strides = [1, 1]} : vector<2x128xf32> to vector<2x32xf32>
    %289 = vector.extract_strided_slice %287 {offsets = [0, 32], sizes = [2, 32], strides = [1, 1]} : vector<2x128xf32> to vector<2x32xf32>
    %290 = vector.extract_strided_slice %287 {offsets = [0, 96], sizes = [2, 32], strides = [1, 1]} : vector<2x128xf32> to vector<2x32xf32>
    %291 = vector.extract_strided_slice %282 {offsets = [0, 64], sizes = [2, 32], strides = [1, 1]} : vector<2x128xf32> to vector<2x32xf32>
    %292 = math.tanh %291 : vector<2x32xf32>
    %293 = arith.mulf %289, %274 : vector<2x32xf32>
    %294 = arith.mulf %288, %292 : vector<2x32xf32>
    %295 = arith.addf %293, %294 : vector<2x32xf32>
    %296 = math.tanh %295 : vector<2x32xf32>
    %297 = arith.mulf %290, %296 : vector<2x32xf32>
    %c4_79 = arith.constant 4 : index
    %c0_80 = arith.constant 0 : index
    %c0_81 = arith.constant 0 : index
    %298 = vector.load %arg5[%c4_79, %c0_80, %c0_81] : memref<8x2x32xf32, #tpu.memory_space<vmem>>, vector<1x2x32xf32>
    %299 = vector.shape_cast %298 : vector<1x2x32xf32> to vector<2x32xf32>
    %300 = vector.shape_cast %297 : vector<2x32xf32> to vector<1x2x32xf32>
    tpu.vector_store %arg5[%c4_79, %c0_80, %c0_81], %300 {strides = array<i32>} : memref<8x2x32xf32, #tpu.memory_space<vmem>>, vector<1x2x32xf32>,
    %301 = vector.extract_strided_slice %193 {offsets = [10, 0], sizes = [2, 128], strides = [1, 1]} : vector<16x128xf32> to vector<2x128xf32>
    %cst_82 = arith.constant dense<0.000000e+00> : vector<2x128xf32>
    %302 = tpu.matmul %297, %189, %cst_82 {dimension_numbers = #tpu.dot_dimension_numbers<[1], [0], [0], [1], [0, 0, 1, 1], [], []>} : vector<2x32xf32>, vector<32x128xf32>, vector<2x128xf32> -> vector<2x128xf32>
    %303 = arith.addf %301, %302 : vector<2x128xf32>
    %304 = arith.negf %303 : vector<2x128xf32>
    %305 = math.exp %304 : vector<2x128xf32>
    %cst_83 = arith.constant 1.000000e+00 : f32
    %306 = vector.broadcast %cst_83 : f32 to vector<2x128xf32>
    %307 = arith.addf %306, %305 : vector<2x128xf32>
    %308 = arith.divf %306, %307 : vector<2x128xf32>
    %309 = vector.extract_strided_slice %308 {offsets = [0, 0], sizes = [2, 32], strides = [1, 1]} : vector<2x128xf32> to vector<2x32xf32>
    %310 = vector.extract_strided_slice %308 {offsets = [0, 32], sizes = [2, 32], strides = [1, 1]} : vector<2x128xf32> to vector<2x32xf32>
    %311 = vector.extract_strided_slice %308 {offsets = [0, 96], sizes = [2, 32], strides = [1, 1]} : vector<2x128xf32> to vector<2x32xf32>
    %312 = vector.extract_strided_slice %303 {offsets = [0, 64], sizes = [2, 32], strides = [1, 1]} : vector<2x128xf32> to vector<2x32xf32>
    %313 = math.tanh %312 : vector<2x32xf32>
    %314 = arith.mulf %310, %295 : vector<2x32xf32>
    %315 = arith.mulf %309, %313 : vector<2x32xf32>
    %316 = arith.addf %314, %315 : vector<2x32xf32>
    %317 = math.tanh %316 : vector<2x32xf32>
    %318 = arith.mulf %311, %317 : vector<2x32xf32>
    %c5_84 = arith.constant 5 : index
    %c0_85 = arith.constant 0 : index
    %c0_86 = arith.constant 0 : index
    %319 = vector.load %arg5[%c5_84, %c0_85, %c0_86] : memref<8x2x32xf32, #tpu.memory_space<vmem>>, vector<1x2x32xf32>
    %320 = vector.shape_cast %319 : vector<1x2x32xf32> to vector<2x32xf32>
    %321 = vector.shape_cast %318 : vector<2x32xf32> to vector<1x2x32xf32>
    tpu.vector_store %arg5[%c5_84, %c0_85, %c0_86], %321 {strides = array<i32>} : memref<8x2x32xf32, #tpu.memory_space<vmem>>, vector<1x2x32xf32>,
    %322 = vector.extract_strided_slice %193 {offsets = [12, 0], sizes = [2, 128], strides = [1, 1]} : vector<16x128xf32> to vector<2x128xf32>
    %cst_87 = arith.constant dense<0.000000e+00> : vector<2x128xf32>
    %323 = tpu.matmul %318, %189, %cst_87 {dimension_numbers = #tpu.dot_dimension_numbers<[1], [0], [0], [1], [0, 0, 1, 1], [], []>} : vector<2x32xf32>, vector<32x128xf32>, vector<2x128xf32> -> vector<2x128xf32>
    %324 = arith.addf %322, %323 : vector<2x128xf32>
    %325 = arith.negf %324 : vector<2x128xf32>
    %326 = math.exp %325 : vector<2x128xf32>
    %cst_88 = arith.constant 1.000000e+00 : f32
    %327 = vector.broadcast %cst_88 : f32 to vector<2x128xf32>
    %328 = arith.addf %327, %326 : vector<2x128xf32>
    %329 = arith.divf %327, %328 : vector<2x128xf32>
    %330 = vector.extract_strided_slice %329 {offsets = [0, 0], sizes = [2, 32], strides = [1, 1]} : vector<2x128xf32> to vector<2x32xf32>
    %331 = vector.extract_strided_slice %329 {offsets = [0, 32], sizes = [2, 32], strides = [1, 1]} : vector<2x128xf32> to vector<2x32xf32>
    %332 = vector.extract_strided_slice %329 {offsets = [0, 96], sizes = [2, 32], strides = [1, 1]} : vector<2x128xf32> to vector<2x32xf32>
    %333 = vector.extract_strided_slice %324 {offsets = [0, 64], sizes = [2, 32], strides = [1, 1]} : vector<2x128xf32> to vector<2x32xf32>
    %334 = math.tanh %333 : vector<2x32xf32>
    %335 = arith.mulf %331, %316 : vector<2x32xf32>
    %336 = arith.mulf %330, %334 : vector<2x32xf32>
    %337 = arith.addf %335, %336 : vector<2x32xf32>
    %338 = math.tanh %337 : vector<2x32xf32>
    %339 = arith.mulf %332, %338 : vector<2x32xf32>
    %c6_89 = arith.constant 6 : index
    %c0_90 = arith.constant 0 : index
    %c0_91 = arith.constant 0 : index
    %340 = vector.load %arg5[%c6_89, %c0_90, %c0_91] : memref<8x2x32xf32, #tpu.memory_space<vmem>>, vector<1x2x32xf32>
    %341 = vector.shape_cast %340 : vector<1x2x32xf32> to vector<2x32xf32>
    %342 = vector.shape_cast %339 : vector<2x32xf32> to vector<1x2x32xf32>
    tpu.vector_store %arg5[%c6_89, %c0_90, %c0_91], %342 {strides = array<i32>} : memref<8x2x32xf32, #tpu.memory_space<vmem>>, vector<1x2x32xf32>,
    %343 = vector.extract_strided_slice %193 {offsets = [14, 0], sizes = [2, 128], strides = [1, 1]} : vector<16x128xf32> to vector<2x128xf32>
    %cst_92 = arith.constant dense<0.000000e+00> : vector<2x128xf32>
    %344 = tpu.matmul %339, %189, %cst_92 {dimension_numbers = #tpu.dot_dimension_numbers<[1], [0], [0], [1], [0, 0, 1, 1], [], []>} : vector<2x32xf32>, vector<32x128xf32>, vector<2x128xf32> -> vector<2x128xf32>
    %345 = arith.addf %343, %344 : vector<2x128xf32>
    %346 = arith.negf %345 : vector<2x128xf32>
    %347 = math.exp %346 : vector<2x128xf32>
    %cst_93 = arith.constant 1.000000e+00 : f32
    %348 = vector.broadcast %cst_93 : f32 to vector<2x128xf32>
    %349 = arith.addf %348, %347 : vector<2x128xf32>
    %350 = arith.divf %348, %349 : vector<2x128xf32>
    %351 = vector.extract_strided_slice %350 {offsets = [0, 0], sizes = [2, 32], strides = [1, 1]} : vector<2x128xf32> to vector<2x32xf32>
    %352 = vector.extract_strided_slice %350 {offsets = [0, 32], sizes = [2, 32], strides = [1, 1]} : vector<2x128xf32> to vector<2x32xf32>
    %353 = vector.extract_strided_slice %350 {offsets = [0, 96], sizes = [2, 32], strides = [1, 1]} : vector<2x128xf32> to vector<2x32xf32>
    %354 = vector.extract_strided_slice %345 {offsets = [0, 64], sizes = [2, 32], strides = [1, 1]} : vector<2x128xf32> to vector<2x32xf32>
    %355 = math.tanh %354 : vector<2x32xf32>
    %356 = arith.mulf %352, %337 : vector<2x32xf32>
    %357 = arith.mulf %351, %355 : vector<2x32xf32>
    %358 = arith.addf %356, %357 : vector<2x32xf32>
    %359 = math.tanh %358 : vector<2x32xf32>
    %360 = arith.mulf %353, %359 : vector<2x32xf32>
    %c7_94 = arith.constant 7 : index
    %c0_95 = arith.constant 0 : index
    %c0_96 = arith.constant 0 : index
    %361 = vector.load %arg5[%c7_94, %c0_95, %c0_96] : memref<8x2x32xf32, #tpu.memory_space<vmem>>, vector<1x2x32xf32>
    %362 = vector.shape_cast %361 : vector<1x2x32xf32> to vector<2x32xf32>
    %363 = vector.shape_cast %360 : vector<2x32xf32> to vector<1x2x32xf32>
    tpu.vector_store %arg5[%c7_94, %c0_95, %c0_96], %363 {strides = array<i32>} : memref<8x2x32xf32, #tpu.memory_space<vmem>>, vector<1x2x32xf32>,
    %c32 = arith.constant 32 : index
    %c0_97 = arith.constant 0 : index
    %364 = vector.load %arg3[%c32, %c0_97] : memref<200x128xf32, #tpu.memory_space<vmem>>, vector<128x128xf32>
    %c160 = arith.constant 160 : index
    %c0_98 = arith.constant 0 : index
    %365 = vector.load %arg3[%c160, %c0_98] : memref<200x128xf32, #tpu.memory_space<vmem>>, vector<32x128xf32>
    %c192 = arith.constant 192 : index
    %c0_99 = arith.constant 0 : index
    %366 = vector.load %arg3[%c192, %c0_99] : memref<200x128xf32, #tpu.memory_space<vmem>>, vector<1x128xf32>
    %cst_100 = arith.constant dense<0.000000e+00> : vector<2x128xf32>
    %367 = tpu.matmul %7, %364, %cst_100 {dimension_numbers = #tpu.dot_dimension_numbers<[1], [0], [0], [1], [0, 0, 1, 1], [], []>} : vector<2x128xf32>, vector<128x128xf32>, vector<2x128xf32> -> vector<2x128xf32>
    %cst_101 = arith.constant dense<0.000000e+00> : vector<2x128xf32>
    %368 = tpu.matmul %360, %365, %cst_101 {dimension_numbers = #tpu.dot_dimension_numbers<[1], [0], [0], [1], [0, 0, 1, 1], [], []>} : vector<2x32xf32>, vector<32x128xf32>, vector<2x128xf32> -> vector<2x128xf32>
    %369 = arith.addf %367, %368 : vector<2x128xf32>
    %370 = vector.broadcast %366 : vector<1x128xf32> to vector<2x128xf32>
    %371 = arith.addf %369, %370 : vector<2x128xf32>
    %372 = arith.negf %371 : vector<2x128xf32>
    %373 = math.exp %372 : vector<2x128xf32>
    %cst_102 = arith.constant 1.000000e+00 : f32
    %374 = vector.broadcast %cst_102 : f32 to vector<2x128xf32>
    %375 = arith.addf %374, %373 : vector<2x128xf32>
    %376 = arith.divf %374, %375 : vector<2x128xf32>
    %c0_103 = arith.constant 0 : index
    %c0_104 = arith.constant 0 : index
    %377 = vector.load %arg4[%c0_103, %c0_104] : memref<2x128xf32, #tpu.memory_space<vmem>>, vector<2x128xf32>
    tpu.vector_store %arg4[%c0_103, %c0_104], %376 {strides = array<i32>} : memref<2x128xf32, #tpu.memory_space<vmem>>, vector<2x128xf32>,
    return
  }
}

</mosaic_0001>

<llo_original>
// kernel: tpu_custom_call.1
$region0: #{tpu_custom_call.1}
  #allocation0 [shape = 'u32[]', space=smem, size = 0x4, offset = 0x4, fixed_abs, tag = 'smem constant byte address 0x4 - core index']
  #allocation1 [shape = 'u32[144,128]{1,0:T(1,128)}', space=vmem, size = 0x12000, scoped, tag = 'internal scratch']
  #allocation2 [shape = 'f32[8,2,32]{2,1,0:T(2,128)}', space=vmem, size = 0x2000, scoped, tag = 'scratch operand']
  %s0 = inlined_call_operand.hbm [shape: f32[2,24], index: 0, kind: input, shape index: {}]
  %s1 = inlined_call_operand.hbm [shape: f32[8,2,16], index: 1, kind: input, shape index: {}]
  %s2 = inlined_call_operand.hbm [shape: f32[128,128], index: 2, kind: input, shape index: {}]
  %s3 = inlined_call_operand.hbm [shape: f32[200,128], index: 3, kind: input, shape index: {}]
  %s4 = inlined_call_operand.hbm [shape: f32[2,128], index: 4, kind: output, shape index: {}]
  %s5 = sld [smem:[#allocation0]]
  $region42: #{tpu_custom_call.1} parent=0
    _
  %s7 = ssub.s32 1, %s5
  %s8 = scalar_select 0, %s7, %s5
  $region1: #{tpu_custom_call.1} parent=0
    #allocation3 [shape = 'u8[1024]{0}', space=vmem, size = 0x400, scoped, tag = 'input window, operand 0, single buffered']
    #allocation4 [shape = 's32[1]{0}', space=sflag, size = 0x4, scoped, tag = 'scoped memory for tpu_custom_call.1']
    #allocation5 [shape = 's32[1]{0}', space=sflag, size = 0x4, scoped, tag = 'scoped memory for tpu_custom_call.1']
    #allocation6 [shape = 'u8[8192]{0}', space=vmem, size = 0x2000, scoped, tag = 'input window, operand 1, single buffered']
    #allocation7 [shape = 's32[1]{0}', space=sflag, size = 0x4, scoped, tag = 'scoped memory for tpu_custom_call.1']
    #allocation8 [shape = 'u8[65536]{0}', space=vmem, size = 0x10000, scoped, tag = 'input window, operand 2, single buffered']
    #allocation9 [shape = 'u8[102400]{0}', space=vmem, size = 0x19000, scoped, tag = 'input window, operand 3, single buffered']
    #allocation10 [shape = 's32[1]{0}', space=sflag, size = 0x4, scoped, tag = 'scoped memory for tpu_custom_call.1']
    #allocation11 [shape = 'u8[1024]{0}', space=vmem, size = 0x400, scoped, tag = 'output window, operand 0, single buffered']
    %9 = vsyncpa [#allocation4], 0
    %10 = vsyncpa [#allocation7], 0
    %11 = vsyncpa [#allocation10], 0
    %12 = vsyncpa [#allocation5], 0
    // Predicated region
    $region2: #{tpu_custom_call.1} parent=1 // pred_check
      _
    $region3: #{tpu_custom_call.1} parent=1 // pred_check_branch
      %14 = sbr.rel (0) target = $region5
    $region4: #{tpu_custom_call.1} parent=1 // pred_region
      %s16 = ssub.s32 32, 32
      %17 = vsyncadd [#allocation4], %s16
      %s19 = sshll.u32 [#allocation3], 4
      %s20 = int_to_ptr.vmem [resolvable:$true] %s19
      %22 = dma.hbm_to_vmem [thread:$0]  %s0, 32, %s20, [#allocation4]
    $region5: #{tpu_custom_call.1} parent=1 // pred_fallthru
      _
    // Predicated region
    $region6: #{tpu_custom_call.1} parent=1 // pred_check
      _
    $region7: #{tpu_custom_call.1} parent=1 // pred_check_branch
      %24 = sbr.rel (0) target = $region9
    $region8: #{tpu_custom_call.1} parent=1 // pred_region
      %s26 = ssub.s32 256, 256
      %27 = vsyncadd [#allocation7], %s26
      %s28 = sshll.u32 [#allocation6], 4
      %s29 = int_to_ptr.vmem [resolvable:$true] %s28
      %34 = dma.hbm_to_vmem [thread:$0]  %s1, 256, %s29, [#allocation7], 32, 32, 2
    $region9: #{tpu_custom_call.1} parent=1 // pred_fallthru
      _
    // Predicated region
    $region10: #{tpu_custom_call.1} parent=1 // pred_check
      _
    $region11: #{tpu_custom_call.1} parent=1 // pred_check_branch
      %36 = sbr.rel (0) target = $region13
    $region12: #{tpu_custom_call.1} parent=1 // pred_region
      %s38 = ssub.s32 2048, 2048
      %39 = vsyncadd [#allocation7], %s38
      %s40 = sshll.u32 [#allocation8], 4
      %s41 = int_to_ptr.vmem [resolvable:$true] %s40
      %46 = dma.hbm_to_vmem [thread:$0]  %s2, 2048, %s41, [#allocation7], 128, 128, 8
    $region13: #{tpu_custom_call.1} parent=1 // pred_fallthru
      _
    // Predicated region
    $region14: #{tpu_custom_call.1} parent=1 // pred_check
      _
    $region15: #{tpu_custom_call.1} parent=1 // pred_check_branch
      %48 = sbr.rel (0) target = $region17
    $region16: #{tpu_custom_call.1} parent=1 // pred_region
      %s50 = ssub.s32 3200, 3200
      %51 = vsyncadd [#allocation10], %s50
      %s52 = sshll.u32 [#allocation9], 4
      %s53 = int_to_ptr.vmem [resolvable:$true] %s52
      %58 = dma.hbm_to_vmem [thread:$0]  %s3, 3200, %s53, [#allocation10], 128, 128, 8
    $region17: #{tpu_custom_call.1} parent=1 // pred_fallthru
      _
    // Predicated region
    $region18: #{tpu_custom_call.1} parent=1 // pred_check
      _
    $region19: #{tpu_custom_call.1} parent=1 // pred_check_branch
      %60 = sbr.rel (0) target = $region21
    $region20: #{tpu_custom_call.1} parent=1 // pred_region
      %61 = dma.done [#allocation4], 32
    $region21: #{tpu_custom_call.1} parent=1 // pred_fallthru
      _
    // Predicated region
    $region22: #{tpu_custom_call.1} parent=1 // pred_check
      _
    $region23: #{tpu_custom_call.1} parent=1 // pred_check_branch
      %63 = sbr.rel (0) target = $region25
    $region24: #{tpu_custom_call.1} parent=1 // pred_region
      %64 = dma.done [#allocation7], 256
    $region25: #{tpu_custom_call.1} parent=1 // pred_fallthru
      _
    // Predicated region
    $region26: #{tpu_custom_call.1} parent=1 // pred_check
      _
    $region27: #{tpu_custom_call.1} parent=1 // pred_check_branch
      %66 = sbr.rel (0) target = $region29
    $region28: #{tpu_custom_call.1} parent=1 // pred_region
      %67 = dma.done [#allocation7], 2048
    $region29: #{tpu_custom_call.1} parent=1 // pred_fallthru
      _
    // Predicated region
    $region30: #{tpu_custom_call.1} parent=1 // pred_check
      _
    $region31: #{tpu_custom_call.1} parent=1 // pred_check_branch
      %69 = sbr.rel (0) target = $region33
    $region32: #{tpu_custom_call.1} parent=1 // pred_region
      %70 = dma.done [#allocation10], 3200
    $region33: #{tpu_custom_call.1} parent=1 // pred_fallthru
      _
    %v71 = vld [vmem:[#allocation9] sm:$0xff]
    %v72 = vld [vmem:[#allocation9 + $0x8] sm:$0xff]
    %v73 = vld [vmem:[#allocation9 + $0x10] sm:$0xff]
    %v74 = vld [vmem:[#allocation9 + $0x18] sm:$0x1]
    %v75 = vld [vmem:[#allocation3] sm:$0x3]
    %v76 = vlaneseq
    %v77 = vshrl.u32 %v76, 7
    %v78 = vsub.s32 0, %v77
    %v79 = vrot.slane %v74, %v78
    %vm80 = vcmask 195584
    %v82 = vsel %vm80, %v75, 0
    %84 = vmatprep.subr.mxu0 0.0
    %85 = vmatpush1.msra.mxu0 %v71
    %86 = vmatprep.subr.mxu0 0.0
    %87 = vmatpush1.msra.mxu0 %v72
    %88 = vmatprep.subr.mxu0 0.0
    %89 = vmatpush1.msra.mxu0 %v73
    %90 = vmatprep.subr.mxu0 0.0
    %91 = vmatpush1.msra.mxu0 0.0
    %92 = vmatprep.subr.mxu0 0.0
    %93 = vmatpush1.msra.mxu0 0.0
    %94 = vmatprep.subr.mxu0 0.0
    %95 = vmatpush1.msra.mxu0 0.0
    %96 = vmatprep.subr.mxu0 0.0
    %97 = vmatpush1.msra.mxu0 0.0
    %98 = vmatprep.subr.mxu0 0.0
    %99 = vmatpush1.msra.mxu0 0.0
    %100 = vmatprep.subr.mxu0 0.0
    %101 = vmatpush1.msra.mxu0 0.0
    %102 = vmatprep.subr.mxu0 0.0
    %103 = vmatpush1.msra.mxu0 0.0
    %104 = vmatprep.subr.mxu0 0.0
    %105 = vmatpush1.msra.mxu0 0.0
    %106 = vmatprep.subr.mxu0 0.0
    %107 = vmatpush1.msra.mxu0 0.0
    %108 = vmatprep.subr.mxu0 0.0
    %109 = vmatpush1.msra.mxu0 0.0
    %110 = vmatprep.subr.mxu0 0.0
    %111 = vmatpush1.msra.mxu0 0.0
    %112 = vmatprep.subr.mxu0 0.0
    %113 = vmatpush1.msra.mxu0 0.0
    %114 = vmatprep.subr.mxu0 0.0
    %115 = vmatpush1.msra.mxu0 0.0
    %116 = vmatprep.subr.mxu0 0.0
    %117 = vmatpush1.msra.mxu0 0.0
    %118 = vmatprep.subr.mxu0 0.0
    %119 = vmatpush1.msra.mxu0 0.0
    %120 = vmatprep.subr.mxu0 0.0
    %121 = vmatpush1.msra.mxu0 0.0
    %122 = vmatprep.subr.mxu0 0.0
    %123 = vmatpush1.msra.mxu0 0.0
    %124 = vmatprep.subr.mxu0 0.0
    %125 = vmatpush1.msra.mxu0 0.0
    %126 = vmatprep.subr.mxu0 0.0
    %127 = vmatpush1.msra.mxu0 0.0
    %128 = vmatprep.subr.mxu0 0.0
    %129 = vmatpush1.msra.mxu0 0.0
    %130 = vmatprep.subr.mxu0 0.0
    %131 = vmatpush1.msra.mxu0 0.0
    %132 = vmatprep.subr.mxu0 0.0
    %133 = vmatpush1.msra.mxu0 0.0
    %134 = vmatprep.subr.mxu0 0.0
    %135 = vmatpush1.msra.mxu0 0.0
    %136 = vmatprep.subr.mxu0 0.0
    %137 = vmatpush1.msra.mxu0 0.0
    %138 = vmatprep.subr.mxu0 0.0
    %139 = vmatpush1.msra.mxu0 0.0
    %140 = vmatprep.subr.mxu0 0.0
    %141 = vmatpush1.msra.mxu0 0.0
    %142 = vmatprep.subr.mxu0 0.0
    %143 = vmatpush1.msra.mxu0 0.0
    %144 = vmatprep.subr.mxu0 0.0
    %145 = vmatpush1.msra.mxu0 0.0
    %146 = vmatprep.subr.mxu0 0.0
    %147 = vmatpush1.msra.mxu0 0.0
    %148 = vmatprep.mubr.f32.mxu0 0.0
    %149 = vmatmul.mubr.f32.gmra.mrb[0].mxu0 %v82
    %v150 = vpop.f32.mrb[0].mxu0
    %v151 = vadd.f32 %v79, %v150
    %v152 = vpop.f32.mrb[0].mxu0
    %153 = vdwg.mxu0
    %v154 = vmax.f32 %v151, 0.0
    %v155 = vld [vmem:[#allocation6] sm:$0x3]
    %v156 = vld [vmem:[#allocation6 + $0x2] sm:$0x3]
    %v157 = vld [vmem:[#allocation6 + $0x4] sm:$0x3]
    %v158 = vld [vmem:[#allocation6 + $0x6] sm:$0x3]
    %v159 = vld [vmem:[#allocation6 + $0x8] sm:$0x3]
    %v160 = vld [vmem:[#allocation6 + $0xa] sm:$0x3]
    %v161 = vld [vmem:[#allocation6 + $0xc] sm:$0x3]
    %v162 = vld [vmem:[#allocation6 + $0xe] sm:$0x3]
    %v163 = vld [vmem:[#allocation8] sm:$0xff]
    %v164 = vld [vmem:[#allocation8 + $0x8] sm:$0xff]
    %v165 = vld [vmem:[#allocation8 + $0x10] sm:$0xff]
    %v166 = vld [vmem:[#allocation8 + $0x18] sm:$0xff]
    %v167 = vld [vmem:[#allocation8 + $0x20] sm:$0xff]
    %v168 = vld [vmem:[#allocation8 + $0x28] sm:$0xff]
    %v169 = vld [vmem:[#allocation8 + $0x30] sm:$0x1]
    %v170 = vlaneseq
    %v171 = vshrl.u32 %v170, 7
    %v172 = vsub.s32 0, %v171
    %v173 = vrot.slane %v169, %v172
    %v182 = vcombine.low %v155, %v156
    %v183 = vcombine.low %v157, %v158
    %v185 = vunpack.c.l.s4 1983009808
    %v186 = vunpack.c.0.s8 %v185
    %v187 = vlaneseq
    %v188 = vshrl.u32 %v187, 7
    %v189 = vsub.s32 %v186, %v188
    %v190 = vrot.slane %v182, %v189
    %v192 = vunpack.c.l.s4 1983009808
    %v193 = vunpack.c.0.s8 %v192
    %v194 = vlaneseq
    %v195 = vshrl.u32 %v194, 7
    %v196 = vsub.s32 %v193, %v195
    %v197 = vrot.slane %v183, %v196
    %v198 = vcombine.low %v190, %v197
    %v199 = vcombine.low %v159, %v160
    %v200 = vcombine.low %v161, %v162
    %v202 = vunpack.c.l.s4 1983009808
    %v203 = vunpack.c.0.s8 %v202
    %v204 = vlaneseq
    %v205 = vshrl.u32 %v204, 7
    %v206 = vsub.s32 %v203, %v205
    %v207 = vrot.slane %v199, %v206
    %v209 = vunpack.c.l.s4 1983009808
    %v210 = vunpack.c.0.s8 %v209
    %v211 = vlaneseq
    %v212 = vshrl.u32 %v211, 7
    %v213 = vsub.s32 %v210, %v212
    %v214 = vrot.slane %v200, %v213
    %v215 = vcombine.low %v207, %v214
    %vm216 = vcmask 130048
    %v217 = vsel %vm216, %v198, 0
    %v219 = vsel %vm216, %v215, 0
    %221 = vmatprep.subr.mxu0 0.0
    %222 = vmatpush1.msra.mxu0 %v163
    %223 = vmatprep.subr.mxu0 0.0
    %224 = vmatpush1.msra.mxu0 %v164
    %225 = vmatprep.subr.mxu0 0.0
    %226 = vmatpush1.msra.mxu0 0.0
    %227 = vmatprep.subr.mxu0 0.0
    %228 = vmatpush1.msra.mxu0 0.0
    %229 = vmatprep.subr.mxu0 0.0
    %230 = vmatpush1.msra.mxu0 0.0
    %231 = vmatprep.subr.mxu0 0.0
    %232 = vmatpush1.msra.mxu0 0.0
    %233 = vmatprep.subr.mxu0 0.0
    %234 = vmatpush1.msra.mxu0 0.0
    %235 = vmatprep.subr.mxu0 0.0
    %236 = vmatpush1.msra.mxu0 0.0
    %237 = vmatprep.subr.mxu0 0.0
    %238 = vmatpush1.msra.mxu0 0.0
    %239 = vmatprep.subr.mxu0 0.0
    %240 = vmatpush1.msra.mxu0 0.0
    %241 = vmatprep.subr.mxu0 0.0
    %242 = vmatpush1.msra.mxu0 0.0
    %243 = vmatprep.subr.mxu0 0.0
    %244 = vmatpush1.msra.mxu0 0.0
    %245 = vmatprep.subr.mxu0 0.0
    %246 = vmatpush1.msra.mxu0 0.0
    %247 = vmatprep.subr.mxu0 0.0
    %248 = vmatpush1.msra.mxu0 0.0
    %249 = vmatprep.subr.mxu0 0.0
    %250 = vmatpush1.msra.mxu0 0.0
    %251 = vmatprep.subr.mxu0 0.0
    %252 = vmatpush1.msra.mxu0 0.0
    %253 = vmatprep.subr.mxu0 0.0
    %254 = vmatpush1.msra.mxu0 0.0
    %255 = vmatprep.subr.mxu0 0.0
    %256 = vmatpush1.msra.mxu0 0.0
    %257 = vmatprep.subr.mxu0 0.0
    %258 = vmatpush1.msra.mxu0 0.0
    %259 = vmatprep.subr.mxu0 0.0
    %260 = vmatpush1.msra.mxu0 0.0
    %261 = vmatprep.subr.mxu0 0.0
    %262 = vmatpush1.msra.mxu0 0.0
    %263 = vmatprep.subr.mxu0 0.0
    %264 = vmatpush1.msra.mxu0 0.0
    %265 = vmatprep.subr.mxu0 0.0
    %266 = vmatpush1.msra.mxu0 0.0
    %267 = vmatprep.subr.mxu0 0.0
    %268 = vmatpush1.msra.mxu0 0.0
    %269 = vmatprep.subr.mxu0 0.0
    %270 = vmatpush1.msra.mxu0 0.0
    %271 = vmatprep.subr.mxu0 0.0
    %272 = vmatpush1.msra.mxu0 0.0
    %273 = vmatprep.subr.mxu0 0.0
    %274 = vmatpush1.msra.mxu0 0.0
    %275 = vmatprep.subr.mxu0 0.0
    %276 = vmatpush1.msra.mxu0 0.0
    %277 = vmatprep.subr.mxu0 0.0
    %278 = vmatpush1.msra.mxu0 0.0
    %279 = vmatprep.subr.mxu0 0.0
    %280 = vmatpush1.msra.mxu0 0.0
    %281 = vmatprep.subr.mxu0 0.0
    %282 = vmatpush1.msra.mxu0 0.0
    %283 = vmatprep.subr.mxu0 0.0
    %284 = vmatpush1.msra.mxu0 0.0
    %285 = vmatprep.mubr.f32.mxu0 0.0
    %286 = vmatmul.mubr.f32.gmra.mrb[0].mxu0 %v217
    %v287 = vpop.f32.mrb[0].mxu0
    %v288 = vadd.f32 %v173, %v287
    %v289 = vpop.f32.mrb[0].mxu0
    %290 = vmatprep.mubr.f32.mxu0 0.0
    %291 = vmatmul.mubr.f32.gmra.mrb[0].mxu0 %v219
    %v292 = vpop.f32.mrb[0].mxu0
    %v293 = vadd.f32 %v173, %v292
    %v294 = vpop.f32.mrb[0].mxu0
    %295 = vdwg.mxu0
    %vm296 = vcmask 261120
    %v298 = vsel %vm296, 0.0, 0
    %300 = vmatprep.subr.mxu0 0.0
    %301 = vmatpush1.msra.mxu0 %v165
    %302 = vmatprep.subr.mxu0 0.0
    %303 = vmatpush1.msra.mxu0 %v166
    %304 = vmatprep.subr.mxu0 0.0
    %305 = vmatpush1.msra.mxu0 %v167
    %306 = vmatprep.subr.mxu0 0.0
    %307 = vmatpush1.msra.mxu0 %v168
    %308 = vmatprep.subr.mxu0 0.0
    %309 = vmatpush1.msra.mxu0 0.0
    %310 = vmatprep.subr.mxu0 0.0
    %311 = vmatpush1.msra.mxu0 0.0
    %312 = vmatprep.subr.mxu0 0.0
    %313 = vmatpush1.msra.mxu0 0.0
    %314 = vmatprep.subr.mxu0 0.0
    %315 = vmatpush1.msra.mxu0 0.0
    %316 = vmatprep.subr.mxu0 0.0
    %317 = vmatpush1.msra.mxu0 0.0
    %318 = vmatprep.subr.mxu0 0.0
    %319 = vmatpush1.msra.mxu0 0.0
    %320 = vmatprep.subr.mxu0 0.0
    %321 = vmatpush1.msra.mxu0 0.0
    %322 = vmatprep.subr.mxu0 0.0
    %323 = vmatpush1.msra.mxu0 0.0
    %324 = vmatprep.subr.mxu0 0.0
    %325 = vmatpush1.msra.mxu0 0.0
    %326 = vmatprep.subr.mxu0 0.0
    %327 = vmatpush1.msra.mxu0 0.0
    %328 = vmatprep.subr.mxu0 0.0
    %329 = vmatpush1.msra.mxu0 0.0
    %330 = vmatprep.subr.mxu0 0.0
    %331 = vmatpush1.msra.mxu0 0.0
    %332 = vmatprep.subr.mxu0 0.0
    %333 = vmatpush1.msra.mxu0 0.0
    %334 = vmatprep.subr.mxu0 0.0
    %335 = vmatpush1.msra.mxu0 0.0
    %336 = vmatprep.subr.mxu0 0.0
    %337 = vmatpush1.msra.mxu0 0.0
    %338 = vmatprep.subr.mxu0 0.0
    %339 = vmatpush1.msra.mxu0 0.0
    %340 = vmatprep.subr.mxu0 0.0
    %341 = vmatpush1.msra.mxu0 0.0
    %342 = vmatprep.subr.mxu0 0.0
    %343 = vmatpush1.msra.mxu0 0.0
    %344 = vmatprep.subr.mxu0 0.0
    %345 = vmatpush1.msra.mxu0 0.0
    %346 = vmatprep.subr.mxu0 0.0
    %347 = vmatpush1.msra.mxu0 0.0
    %348 = vmatprep.subr.mxu0 0.0
    %349 = vmatpush1.msra.mxu0 0.0
    %350 = vmatprep.subr.mxu0 0.0
    %351 = vmatpush1.msra.mxu0 0.0
    %352 = vmatprep.subr.mxu0 0.0
    %353 = vmatpush1.msra.mxu0 0.0
    %354 = vmatprep.subr.mxu0 0.0
    %355 = vmatpush1.msra.mxu0 0.0
    %356 = vmatprep.subr.mxu0 0.0
    %357 = vmatpush1.msra.mxu0 0.0
    %358 = vmatprep.subr.mxu0 0.0
    %359 = vmatpush1.msra.mxu0 0.0
    %360 = vmatprep.subr.mxu0 0.0
    %361 = vmatpush1.msra.mxu0 0.0
    %362 = vmatprep.subr.mxu0 0.0
    %363 = vmatpush1.msra.mxu0 0.0
    %364 = vmatprep.mubr.f32.mxu0 0.0
    %365 = vmatmul.mubr.f32.gmra.mrb[0].mxu0 %v298
    %v366 = vpop.f32.mrb[0].mxu0
    %v367 = vadd.f32 0.0, %v366
    %v368 = vpop.f32.mrb[0].mxu0
    %369 = vdwg.mxu0
    %v370 = vadd.f32 %v288, %v367
    %v371 = vxor.u32 %v370, 2147483648
    %v372 = vmul.f32 %v371, 1.442695
    %v373 = vpow.pop %v372
    %v374 = vadd.f32 %v373, 1.0
    %v375 = vrcp.pop %v374
    %v376 = vmul.f32 1.0, %v375
    %v377 = vtanh.pop %v370
    %v378 = vmul.f32 %v376, 0.0
    %380 = vrot.lane.b32.xlu0 %v377, 64
    %v381 = vpop.permute.xlu0 %380
    %v383 = vmul.f32 %v376, %v381
    %385 = vrot.lane.b32.xlu0 %v383, 32
    %v386 = vpop.permute.xlu0 %385
    %v388 = vadd.f32 %v378, %v386
    %v389 = vtanh.pop %v388
    %391 = vrot.lane.b32.xlu0 %v389, 64
    %v392 = vpop.permute.xlu0 %391
    %v394 = vmul.f32 %v376, %v392
    %396 = vrot.lane.b32.xlu0 %v394, 32
    %v397 = vpop.permute.xlu0 %396
    %vm399 = vcmask 254976
    %400 = vst.msk [vmem:[#allocation2] sm:$0x3] %vm399, %v397
    %v401 = vsel %vm296, %v397, 0
    %403 = vmatprep.subr.mxu0 0.0
    %404 = vmatpush1.msra.mxu0 %v165
    %405 = vmatprep.subr.mxu0 0.0
    %406 = vmatpush1.msra.mxu0 %v166
    %407 = vmatprep.subr.mxu0 0.0
    %408 = vmatpush1.msra.mxu0 %v167
    %409 = vmatprep.subr.mxu0 0.0
    %410 = vmatpush1.msra.mxu0 %v168
    %411 = vmatprep.subr.mxu0 0.0
    %412 = vmatpush1.msra.mxu0 0.0
    %413 = vmatprep.subr.mxu0 0.0
    %414 = vmatpush1.msra.mxu0 0.0
    %415 = vmatprep.subr.mxu0 0.0
    %416 = vmatpush1.msra.mxu0 0.0
    %417 = vmatprep.subr.mxu0 0.0
    %418 = vmatpush1.msra.mxu0 0.0
    %419 = vmatprep.subr.mxu0 0.0
    %420 = vmatpush1.msra.mxu0 0.0
    %421 = vmatprep.subr.mxu0 0.0
    %422 = vmatpush1.msra.mxu0 0.0
    %423 = vmatprep.subr.mxu0 0.0
    %424 = vmatpush1.msra.mxu0 0.0
    %425 = vmatprep.subr.mxu0 0.0
    %426 = vmatpush1.msra.mxu0 0.0
    %427 = vmatprep.subr.mxu0 0.0
    %428 = vmatpush1.msra.mxu0 0.0
    %429 = vmatprep.subr.mxu0 0.0
    %430 = vmatpush1.msra.mxu0 0.0
    %431 = vmatprep.subr.mxu0 0.0
    %432 = vmatpush1.msra.mxu0 0.0
    %433 = vmatprep.subr.mxu0 0.0
    %434 = vmatpush1.msra.mxu0 0.0
    %435 = vmatprep.subr.mxu0 0.0
    %436 = vmatpush1.msra.mxu0 0.0
    %437 = vmatprep.subr.mxu0 0.0
    %438 = vmatpush1.msra.mxu0 0.0
    %439 = vmatprep.subr.mxu0 0.0
    %440 = vmatpush1.msra.mxu0 0.0
    %441 = vmatprep.subr.mxu0 0.0
    %442 = vmatpush1.msra.mxu0 0.0
    %443 = vmatprep.subr.mxu0 0.0
    %444 = vmatpush1.msra.mxu0 0.0
    %445 = vmatprep.subr.mxu0 0.0
    %446 = vmatpush1.msra.mxu0 0.0
    %447 = vmatprep.subr.mxu0 0.0
    %448 = vmatpush1.msra.mxu0 0.0
    %449 = vmatprep.subr.mxu0 0.0
    %450 = vmatpush1.msra.mxu0 0.0
    %451 = vmatprep.subr.mxu0 0.0
    %452 = vmatpush1.msra.mxu0 0.0
    %453 = vmatprep.subr.mxu0 0.0
    %454 = vmatpush1.msra.mxu0 0.0
    %455 = vmatprep.subr.mxu0 0.0
    %456 = vmatpush1.msra.mxu0 0.0
    %457 = vmatprep.subr.mxu0 0.0
    %458 = vmatpush1.msra.mxu0 0.0
    %459 = vmatprep.subr.mxu0 0.0
    %460 = vmatpush1.msra.mxu0 0.0
    %461 = vmatprep.subr.mxu0 0.0
    %462 = vmatpush1.msra.mxu0 0.0
    %463 = vmatprep.subr.mxu0 0.0
    %464 = vmatpush1.msra.mxu0 0.0
    %465 = vmatprep.subr.mxu0 0.0
    %466 = vmatpush1.msra.mxu0 0.0
    %467 = vmatprep.mubr.f32.mxu0 0.0
    %468 = vmatmul.mubr.f32.gmra.mrb[0].mxu0 %v401
    %v469 = vpop.f32.mrb[0].mxu0
    %v470 = vadd.f32 0.0, %v469
    %v471 = vpop.f32.mrb[0].mxu0
    %472 = vdwg.mxu0
    %v474 = vrot.slane %v470, 6
    %v476 = vadd.f32 %v288, %v474
    %v477 = vxor.u32 %v476, 2147483648
    %v478 = vmul.f32 %v477, 1.442695
    %v479 = vpow.pop %v478
    %v480 = vadd.f32 %v479, 1.0
    %v481 = vrcp.pop %v480
    %v482 = vmul.f32 1.0, %v481
    %v483 = vtanh.pop %v476
    %v485 = vrot.slane %v388, 6
    %v487 = vmul.f32 %v482, %v485
    %489 = vrot.lane.b32.xlu0 %v483, 64
    %v490 = vpop.permute.xlu0 %489
    %v492 = vmul.f32 %v482, %v490
    %494 = vrot.lane.b32.xlu0 %v492, 32
    %v495 = vpop.permute.xlu0 %494
    %v497 = vadd.f32 %v487, %v495
    %v498 = vtanh.pop %v497
    %500 = vrot.lane.b32.xlu0 %v498, 64
    %v501 = vpop.permute.xlu0 %500
    %v503 = vmul.f32 %v482, %v501
    %505 = vrot.lane.b32.xlu0 %v503, 32
    %v506 = vpop.permute.xlu0 %505
    %s508 = scalar_lea.vmem [#allocation2], 2
    %vm509 = vcmask 257026
    %510 = vst.msk [vmem:[%s508 - $0x2] sm:$0xc] %vm509, %v506
    %v511 = vrot.slane %v503, 2
    %512 = vrot.lane.b32.xlu0 %v511, 32
    %v513 = vpop.permute.xlu0 %512
    %v514 = vsel %vm296, %v513, 0
    %516 = vmatprep.subr.mxu0 0.0
    %517 = vmatpush1.msra.mxu0 %v165
    %518 = vmatprep.subr.mxu0 0.0
    %519 = vmatpush1.msra.mxu0 %v166
    %520 = vmatprep.subr.mxu0 0.0
    %521 = vmatpush1.msra.mxu0 %v167
    %522 = vmatprep.subr.mxu0 0.0
    %523 = vmatpush1.msra.mxu0 %v168
    %524 = vmatprep.subr.mxu0 0.0
    %525 = vmatpush1.msra.mxu0 0.0
    %526 = vmatprep.subr.mxu0 0.0
    %527 = vmatpush1.msra.mxu0 0.0
    %528 = vmatprep.subr.mxu0 0.0
    %529 = vmatpush1.msra.mxu0 0.0
    %530 = vmatprep.subr.mxu0 0.0
    %531 = vmatpush1.msra.mxu0 0.0
    %532 = vmatprep.subr.mxu0 0.0
    %533 = vmatpush1.msra.mxu0 0.0
    %534 = vmatprep.subr.mxu0 0.0
    %535 = vmatpush1.msra.mxu0 0.0
    %536 = vmatprep.subr.mxu0 0.0
    %537 = vmatpush1.msra.mxu0 0.0
    %538 = vmatprep.subr.mxu0 0.0
    %539 = vmatpush1.msra.mxu0 0.0
    %540 = vmatprep.subr.mxu0 0.0
    %541 = vmatpush1.msra.mxu0 0.0
    %542 = vmatprep.subr.mxu0 0.0
    %543 = vmatpush1.msra.mxu0 0.0
    %544 = vmatprep.subr.mxu0 0.0
    %545 = vmatpush1.msra.mxu0 0.0
    %546 = vmatprep.subr.mxu0 0.0
    %547 = vmatpush1.msra.mxu0 0.0
    %548 = vmatprep.subr.mxu0 0.0
    %549 = vmatpush1.msra.mxu0 0.0
    %550 = vmatprep.subr.mxu0 0.0
    %551 = vmatpush1.msra.mxu0 0.0
    %552 = vmatprep.subr.mxu0 0.0
    %553 = vmatpush1.msra.mxu0 0.0
    %554 = vmatprep.subr.mxu0 0.0
    %555 = vmatpush1.msra.mxu0 0.0
    %556 = vmatprep.subr.mxu0 0.0
    %557 = vmatpush1.msra.mxu0 0.0
    %558 = vmatprep.subr.mxu0 0.0
    %559 = vmatpush1.msra.mxu0 0.0
    %560 = vmatprep.subr.mxu0 0.0
    %561 = vmatpush1.msra.mxu0 0.0
    %562 = vmatprep.subr.mxu0 0.0
    %563 = vmatpush1.msra.mxu0 0.0
    %564 = vmatprep.subr.mxu0 0.0
    %565 = vmatpush1.msra.mxu0 0.0
    %566 = vmatprep.subr.mxu0 0.0
    %567 = vmatpush1.msra.mxu0 0.0
    %568 = vmatprep.subr.mxu0 0.0
    %569 = vmatpush1.msra.mxu0 0.0
    %570 = vmatprep.subr.mxu0 0.0
    %571 = vmatpush1.msra.mxu0 0.0
    %572 = vmatprep.subr.mxu0 0.0
    %573 = vmatpush1.msra.mxu0 0.0
    %574 = vmatprep.subr.mxu0 0.0
    %575 = vmatpush1.msra.mxu0 0.0
    %576 = vmatprep.subr.mxu0 0.0
    %577 = vmatpush1.msra.mxu0 0.0
    %578 = vmatprep.subr.mxu0 0.0
    %579 = vmatpush1.msra.mxu0 0.0
    %580 = vmatprep.mubr.f32.mxu0 0.0
    %581 = vmatmul.mubr.f32.gmra.mrb[0].mxu0 %v514
    %v582 = vpop.f32.mrb[0].mxu0
    %v583 = vadd.f32 0.0, %v582
    %v584 = vpop.f32.mrb[0].mxu0
    %585 = vdwg.mxu0
    %v587 = vrot.slane %v583, 4
    %v589 = vadd.f32 %v288, %v587
    %v590 = vxor.u32 %v589, 2147483648
    %v591 = vmul.f32 %v590, 1.442695
    %v592 = vpow.pop %v591
    %v593 = vadd.f32 %v592, 1.0
    %v594 = vrcp.pop %v593
    %v595 = vmul.f32 1.0, %v594
    %v596 = vtanh.pop %v589
    %v598 = vrot.slane %v497, 6
    %v600 = vmul.f32 %v595, %v598
    %602 = vrot.lane.b32.xlu0 %v596, 64
    %v603 = vpop.permute.xlu0 %602
    %v605 = vmul.f32 %v595, %v603
    %607 = vrot.lane.b32.xlu0 %v605, 32
    %v608 = vpop.permute.xlu0 %607
    %v610 = vadd.f32 %v600, %v608
    %v611 = vtanh.pop %v610
    %613 = vrot.lane.b32.xlu0 %v611, 64
    %v614 = vpop.permute.xlu0 %613
    %v616 = vmul.f32 %v595, %v614
    %618 = vrot.lane.b32.xlu0 %v616, 32
    %v619 = vpop.permute.xlu0 %618
    %s621 = scalar_lea.vmem [#allocation2], 4
    %vm622 = vcmask 259076
    %623 = vst.msk [vmem:[%s621 - $0x4] sm:$0x30] %vm622, %v619
    %v624 = vrot.slane %v616, 4
    %625 = vrot.lane.b32.xlu0 %v624, 32
    %v626 = vpop.permute.xlu0 %625
    %v627 = vsel %vm296, %v626, 0
    %629 = vmatprep.subr.mxu0 0.0
    %630 = vmatpush1.msra.mxu0 %v165
    %631 = vmatprep.subr.mxu0 0.0
    %632 = vmatpush1.msra.mxu0 %v166
    %633 = vmatprep.subr.mxu0 0.0
    %634 = vmatpush1.msra.mxu0 %v167
    %635 = vmatprep.subr.mxu0 0.0
    %636 = vmatpush1.msra.mxu0 %v168
    %637 = vmatprep.subr.mxu0 0.0
    %638 = vmatpush1.msra.mxu0 0.0
    %639 = vmatprep.subr.mxu0 0.0
    %640 = vmatpush1.msra.mxu0 0.0
    %641 = vmatprep.subr.mxu0 0.0
    %642 = vmatpush1.msra.mxu0 0.0
    %643 = vmatprep.subr.mxu0 0.0
    %644 = vmatpush1.msra.mxu0 0.0
    %645 = vmatprep.subr.mxu0 0.0
    %646 = vmatpush1.msra.mxu0 0.0
    %647 = vmatprep.subr.mxu0 0.0
    %648 = vmatpush1.msra.mxu0 0.0
    %649 = vmatprep.subr.mxu0 0.0
    %650 = vmatpush1.msra.mxu0 0.0
    %651 = vmatprep.subr.mxu0 0.0
    %652 = vmatpush1.msra.mxu0 0.0
    %653 = vmatprep.subr.mxu0 0.0
    %654 = vmatpush1.msra.mxu0 0.0
    %655 = vmatprep.subr.mxu0 0.0
    %656 = vmatpush1.msra.mxu0 0.0
    %657 = vmatprep.subr.mxu0 0.0
    %658 = vmatpush1.msra.mxu0 0.0
    %659 = vmatprep.subr.mxu0 0.0
    %660 = vmatpush1.msra.mxu0 0.0
    %661 = vmatprep.subr.mxu0 0.0
    %662 = vmatpush1.msra.mxu0 0.0
    %663 = vmatprep.subr.mxu0 0.0
    %664 = vmatpush1.msra.mxu0 0.0
    %665 = vmatprep.subr.mxu0 0.0
    %666 = vmatpush1.msra.mxu0 0.0
    %667 = vmatprep.subr.mxu0 0.0
    %668 = vmatpush1.msra.mxu0 0.0
    %669 = vmatprep.subr.mxu0 0.0
    %670 = vmatpush1.msra.mxu0 0.0
    %671 = vmatprep.subr.mxu0 0.0
    %672 = vmatpush1.msra.mxu0 0.0
    %673 = vmatprep.subr.mxu0 0.0
    %674 = vmatpush1.msra.mxu0 0.0
    %675 = vmatprep.subr.mxu0 0.0
    %676 = vmatpush1.msra.mxu0 0.0
    %677 = vmatprep.subr.mxu0 0.0
    %678 = vmatpush1.msra.mxu0 0.0
    %679 = vmatprep.subr.mxu0 0.0
    %680 = vmatpush1.msra.mxu0 0.0
    %681 = vmatprep.subr.mxu0 0.0
    %682 = vmatpush1.msra.mxu0 0.0
    %683 = vmatprep.subr.mxu0 0.0
    %684 = vmatpush1.msra.mxu0 0.0
    %685 = vmatprep.subr.mxu0 0.0
    %686 = vmatpush1.msra.mxu0 0.0
    %687 = vmatprep.subr.mxu0 0.0
    %688 = vmatpush1.msra.mxu0 0.0
    %689 = vmatprep.subr.mxu0 0.0
    %690 = vmatpush1.msra.mxu0 0.0
    %691 = vmatprep.subr.mxu0 0.0
    %692 = vmatpush1.msra.mxu0 0.0
    %693 = vmatprep.mubr.f32.mxu0 0.0
    %694 = vmatmul.mubr.f32.gmra.mrb[0].mxu0 %v627
    %v695 = vpop.f32.mrb[0].mxu0
    %v696 = vadd.f32 0.0, %v695
    %v697 = vpop.f32.mrb[0].mxu0
    %698 = vdwg.mxu0
    %v700 = vrot.slane %v696, 2
    %v702 = vadd.f32 %v288, %v700
    %v703 = vxor.u32 %v702, 2147483648
    %v704 = vmul.f32 %v703, 1.442695
    %v705 = vpow.pop %v704
    %v706 = vadd.f32 %v705, 1.0
    %v707 = vrcp.pop %v706
    %v708 = vmul.f32 1.0, %v707
    %v709 = vtanh.pop %v702
    %v711 = vrot.slane %v610, 6
    %v713 = vmul.f32 %v708, %v711
    %715 = vrot.lane.b32.xlu0 %v709, 64
    %v716 = vpop.permute.xlu0 %715
    %v718 = vmul.f32 %v708, %v716
    %720 = vrot.lane.b32.xlu0 %v718, 32
    %v721 = vpop.permute.xlu0 %720
    %v723 = vadd.f32 %v713, %v721
    %v724 = vtanh.pop %v723
    %726 = vrot.lane.b32.xlu0 %v724, 64
    %v727 = vpop.permute.xlu0 %726
    %v729 = vmul.f32 %v708, %v727
    %731 = vrot.lane.b32.xlu0 %v729, 32
    %v732 = vpop.permute.xlu0 %731
    %s734 = scalar_lea.vmem [#allocation2], 6
    %vm735 = vcmask 261126
    %736 = vst.msk [vmem:[%s734 - $0x6] sm:$0xc0] %vm735, %v732
    %v737 = vrot.slane %v729, 6
    %738 = vrot.lane.b32.xlu0 %v737, 32
    %v739 = vpop.permute.xlu0 %738
    %v740 = vsel %vm296, %v739, 0
    %742 = vmatprep.subr.mxu0 0.0
    %743 = vmatpush1.msra.mxu0 %v165
    %744 = vmatprep.subr.mxu0 0.0
    %745 = vmatpush1.msra.mxu0 %v166
    %746 = vmatprep.subr.mxu0 0.0
    %747 = vmatpush1.msra.mxu0 %v167
    %748 = vmatprep.subr.mxu0 0.0
    %749 = vmatpush1.msra.mxu0 %v168
    %750 = vmatprep.subr.mxu0 0.0
    %751 = vmatpush1.msra.mxu0 0.0
    %752 = vmatprep.subr.mxu0 0.0
    %753 = vmatpush1.msra.mxu0 0.0
    %754 = vmatprep.subr.mxu0 0.0
    %755 = vmatpush1.msra.mxu0 0.0
    %756 = vmatprep.subr.mxu0 0.0
    %757 = vmatpush1.msra.mxu0 0.0
    %758 = vmatprep.subr.mxu0 0.0
    %759 = vmatpush1.msra.mxu0 0.0
    %760 = vmatprep.subr.mxu0 0.0
    %761 = vmatpush1.msra.mxu0 0.0
    %762 = vmatprep.subr.mxu0 0.0
    %763 = vmatpush1.msra.mxu0 0.0
    %764 = vmatprep.subr.mxu0 0.0
    %765 = vmatpush1.msra.mxu0 0.0
    %766 = vmatprep.subr.mxu0 0.0
    %767 = vmatpush1.msra.mxu0 0.0
    %768 = vmatprep.subr.mxu0 0.0
    %769 = vmatpush1.msra.mxu0 0.0
    %770 = vmatprep.subr.mxu0 0.0
    %771 = vmatpush1.msra.mxu0 0.0
    %772 = vmatprep.subr.mxu0 0.0
    %773 = vmatpush1.msra.mxu0 0.0
    %774 = vmatprep.subr.mxu0 0.0
    %775 = vmatpush1.msra.mxu0 0.0
    %776 = vmatprep.subr.mxu0 0.0
    %777 = vmatpush1.msra.mxu0 0.0
    %778 = vmatprep.subr.mxu0 0.0
    %779 = vmatpush1.msra.mxu0 0.0
    %780 = vmatprep.subr.mxu0 0.0
    %781 = vmatpush1.msra.mxu0 0.0
    %782 = vmatprep.subr.mxu0 0.0
    %783 = vmatpush1.msra.mxu0 0.0
    %784 = vmatprep.subr.mxu0 0.0
    %785 = vmatpush1.msra.mxu0 0.0
    %786 = vmatprep.subr.mxu0 0.0
    %787 = vmatpush1.msra.mxu0 0.0
    %788 = vmatprep.subr.mxu0 0.0
    %789 = vmatpush1.msra.mxu0 0.0
    %790 = vmatprep.subr.mxu0 0.0
    %791 = vmatpush1.msra.mxu0 0.0
    %792 = vmatprep.subr.mxu0 0.0
    %793 = vmatpush1.msra.mxu0 0.0
    %794 = vmatprep.subr.mxu0 0.0
    %795 = vmatpush1.msra.mxu0 0.0
    %796 = vmatprep.subr.mxu0 0.0
    %797 = vmatpush1.msra.mxu0 0.0
    %798 = vmatprep.subr.mxu0 0.0
    %799 = vmatpush1.msra.mxu0 0.0
    %800 = vmatprep.subr.mxu0 0.0
    %801 = vmatpush1.msra.mxu0 0.0
    %802 = vmatprep.subr.mxu0 0.0
    %803 = vmatpush1.msra.mxu0 0.0
    %804 = vmatprep.subr.mxu0 0.0
    %805 = vmatpush1.msra.mxu0 0.0
    %806 = vmatprep.mubr.f32.mxu0 0.0
    %807 = vmatmul.mubr.f32.gmra.mrb[0].mxu0 %v740
    %v808 = vpop.f32.mrb[0].mxu0
    %v809 = vadd.f32 0.0, %v808
    %v810 = vpop.f32.mrb[0].mxu0
    %811 = vdwg.mxu0
    %v812 = vadd.f32 %v293, %v809
    %v813 = vxor.u32 %v812, 2147483648
    %v814 = vmul.f32 %v813, 1.442695
    %v815 = vpow.pop %v814
    %v816 = vadd.f32 %v815, 1.0
    %v817 = vrcp.pop %v816
    %v818 = vmul.f32 1.0, %v817
    %v819 = vtanh.pop %v812
    %v821 = vrot.slane %v723, 6
    %v823 = vmul.f32 %v818, %v821
    %825 = vrot.lane.b32.xlu0 %v819, 64
    %v826 = vpop.permute.xlu0 %825
    %v828 = vmul.f32 %v818, %v826
    %830 = vrot.lane.b32.xlu0 %v828, 32
    %v831 = vpop.permute.xlu0 %830
    %v833 = vadd.f32 %v823, %v831
    %v834 = vtanh.pop %v833
    %836 = vrot.lane.b32.xlu0 %v834, 64
    %v837 = vpop.permute.xlu0 %836
    %v839 = vmul.f32 %v818, %v837
    %841 = vrot.lane.b32.xlu0 %v839, 32
    %v842 = vpop.permute.xlu0 %841
    %s844 = scalar_lea.vmem [#allocation2], 8
    %845 = vst.msk [vmem:[%s844] sm:$0x3] %vm399, %v842
    %v846 = vsel %vm296, %v842, 0
    %848 = vmatprep.subr.mxu0 0.0
    %849 = vmatpush1.msra.mxu0 %v165
    %850 = vmatprep.subr.mxu0 0.0
    %851 = vmatpush1.msra.mxu0 %v166
    %852 = vmatprep.subr.mxu0 0.0
    %853 = vmatpush1.msra.mxu0 %v167
    %854 = vmatprep.subr.mxu0 0.0
    %855 = vmatpush1.msra.mxu0 %v168
    %856 = vmatprep.subr.mxu0 0.0
    %857 = vmatpush1.msra.mxu0 0.0
    %858 = vmatprep.subr.mxu0 0.0
    %859 = vmatpush1.msra.mxu0 0.0
    %860 = vmatprep.subr.mxu0 0.0
    %861 = vmatpush1.msra.mxu0 0.0
    %862 = vmatprep.subr.mxu0 0.0
    %863 = vmatpush1.msra.mxu0 0.0
    %864 = vmatprep.subr.mxu0 0.0
    %865 = vmatpush1.msra.mxu0 0.0
    %866 = vmatprep.subr.mxu0 0.0
    %867 = vmatpush1.msra.mxu0 0.0
    %868 = vmatprep.subr.mxu0 0.0
    %869 = vmatpush1.msra.mxu0 0.0
    %870 = vmatprep.subr.mxu0 0.0
    %871 = vmatpush1.msra.mxu0 0.0
    %872 = vmatprep.subr.mxu0 0.0
    %873 = vmatpush1.msra.mxu0 0.0
    %874 = vmatprep.subr.mxu0 0.0
    %875 = vmatpush1.msra.mxu0 0.0
    %876 = vmatprep.subr.mxu0 0.0
    %877 = vmatpush1.msra.mxu0 0.0
    %878 = vmatprep.subr.mxu0 0.0
    %879 = vmatpush1.msra.mxu0 0.0
    %880 = vmatprep.subr.mxu0 0.0
    %881 = vmatpush1.msra.mxu0 0.0
    %882 = vmatprep.subr.mxu0 0.0
    %883 = vmatpush1.msra.mxu0 0.0
    %884 = vmatprep.subr.mxu0 0.0
    %885 = vmatpush1.msra.mxu0 0.0
    %886 = vmatprep.subr.mxu0 0.0
    %887 = vmatpush1.msra.mxu0 0.0
    %888 = vmatprep.subr.mxu0 0.0
    %889 = vmatpush1.msra.mxu0 0.0
    %890 = vmatprep.subr.mxu0 0.0
    %891 = vmatpush1.msra.mxu0 0.0
    %892 = vmatprep.subr.mxu0 0.0
    %893 = vmatpush1.msra.mxu0 0.0
    %894 = vmatprep.subr.mxu0 0.0
    %895 = vmatpush1.msra.mxu0 0.0
    %896 = vmatprep.subr.mxu0 0.0
    %897 = vmatpush1.msra.mxu0 0.0
    %898 = vmatprep.subr.mxu0 0.0
    %899 = vmatpush1.msra.mxu0 0.0
    %900 = vmatprep.subr.mxu0 0.0
    %901 = vmatpush1.msra.mxu0 0.0
    %902 = vmatprep.subr.mxu0 0.0
    %903 = vmatpush1.msra.mxu0 0.0
    %904 = vmatprep.subr.mxu0 0.0
    %905 = vmatpush1.msra.mxu0 0.0
    %906 = vmatprep.subr.mxu0 0.0
    %907 = vmatpush1.msra.mxu0 0.0
    %908 = vmatprep.subr.mxu0 0.0
    %909 = vmatpush1.msra.mxu0 0.0
    %910 = vmatprep.subr.mxu0 0.0
    %911 = vmatpush1.msra.mxu0 0.0
    %912 = vmatprep.mubr.f32.mxu0 0.0
    %913 = vmatmul.mubr.f32.gmra.mrb[0].mxu0 %v846
    %v914 = vpop.f32.mrb[0].mxu0
    %v915 = vadd.f32 0.0, %v914
    %v916 = vpop.f32.mrb[0].mxu0
    %917 = vdwg.mxu0
    %v919 = vrot.slane %v915, 6
    %v921 = vadd.f32 %v293, %v919
    %v922 = vxor.u32 %v921, 2147483648
    %v923 = vmul.f32 %v922, 1.442695
    %v924 = vpow.pop %v923
    %v925 = vadd.f32 %v924, 1.0
    %v926 = vrcp.pop %v925
    %v927 = vmul.f32 1.0, %v926
    %v928 = vtanh.pop %v921
    %v930 = vrot.slane %v833, 6
    %v932 = vmul.f32 %v927, %v930
    %934 = vrot.lane.b32.xlu0 %v928, 64
    %v935 = vpop.permute.xlu0 %934
    %v937 = vmul.f32 %v927, %v935
    %939 = vrot.lane.b32.xlu0 %v937, 32
    %v940 = vpop.permute.xlu0 %939
    %v942 = vadd.f32 %v932, %v940
    %v943 = vtanh.pop %v942
    %945 = vrot.lane.b32.xlu0 %v943, 64
    %v946 = vpop.permute.xlu0 %945
    %v948 = vmul.f32 %v927, %v946
    %950 = vrot.lane.b32.xlu0 %v948, 32
    %v951 = vpop.permute.xlu0 %950
    %s953 = scalar_lea.vmem [#allocation2], 10
    %954 = vst.msk [vmem:[%s953 - $0x2] sm:$0xc] %vm509, %v951
    %v955 = vrot.slane %v948, 2
    %956 = vrot.lane.b32.xlu0 %v955, 32
    %v957 = vpop.permute.xlu0 %956
    %v958 = vsel %vm296, %v957, 0
    %960 = vmatprep.subr.mxu0 0.0
    %961 = vmatpush1.msra.mxu0 %v165
    %962 = vmatprep.subr.mxu0 0.0
    %963 = vmatpush1.msra.mxu0 %v166
    %964 = vmatprep.subr.mxu0 0.0
    %965 = vmatpush1.msra.mxu0 %v167
    %966 = vmatprep.subr.mxu0 0.0
    %967 = vmatpush1.msra.mxu0 %v168
    %968 = vmatprep.subr.mxu0 0.0
    %969 = vmatpush1.msra.mxu0 0.0
    %970 = vmatprep.subr.mxu0 0.0
    %971 = vmatpush1.msra.mxu0 0.0
    %972 = vmatprep.subr.mxu0 0.0
    %973 = vmatpush1.msra.mxu0 0.0
    %974 = vmatprep.subr.mxu0 0.0
    %975 = vmatpush1.msra.mxu0 0.0
    %976 = vmatprep.subr.mxu0 0.0
    %977 = vmatpush1.msra.mxu0 0.0
    %978 = vmatprep.subr.mxu0 0.0
    %979 = vmatpush1.msra.mxu0 0.0
    %980 = vmatprep.subr.mxu0 0.0
    %981 = vmatpush1.msra.mxu0 0.0
    %982 = vmatprep.subr.mxu0 0.0
    %983 = vmatpush1.msra.mxu0 0.0
    %984 = vmatprep.subr.mxu0 0.0
    %985 = vmatpush1.msra.mxu0 0.0
    %986 = vmatprep.subr.mxu0 0.0
    %987 = vmatpush1.msra.mxu0 0.0
    %988 = vmatprep.subr.mxu0 0.0
    %989 = vmatpush1.msra.mxu0 0.0
    %990 = vmatprep.subr.mxu0 0.0
    %991 = vmatpush1.msra.mxu0 0.0
    %992 = vmatprep.subr.mxu0 0.0
    %993 = vmatpush1.msra.mxu0 0.0
    %994 = vmatprep.subr.mxu0 0.0
    %995 = vmatpush1.msra.mxu0 0.0
    %996 = vmatprep.subr.mxu0 0.0
    %997 = vmatpush1.msra.mxu0 0.0
    %998 = vmatprep.subr.mxu0 0.0
    %999 = vmatpush1.msra.mxu0 0.0
    %1000 = vmatprep.subr.mxu0 0.0
    %1001 = vmatpush1.msra.mxu0 0.0
    %1002 = vmatprep.subr.mxu0 0.0
    %1003 = vmatpush1.msra.mxu0 0.0
    %1004 = vmatprep.subr.mxu0 0.0
    %1005 = vmatpush1.msra.mxu0 0.0
    %1006 = vmatprep.subr.mxu0 0.0
    %1007 = vmatpush1.msra.mxu0 0.0
    %1008 = vmatprep.subr.mxu0 0.0
    %1009 = vmatpush1.msra.mxu0 0.0
    %1010 = vmatprep.subr.mxu0 0.0
    %1011 = vmatpush1.msra.mxu0 0.0
    %1012 = vmatprep.subr.mxu0 0.0
    %1013 = vmatpush1.msra.mxu0 0.0
    %1014 = vmatprep.subr.mxu0 0.0
    %1015 = vmatpush1.msra.mxu0 0.0
    %1016 = vmatprep.subr.mxu0 0.0
    %1017 = vmatpush1.msra.mxu0 0.0
    %1018 = vmatprep.subr.mxu0 0.0
    %1019 = vmatpush1.msra.mxu0 0.0
    %1020 = vmatprep.subr.mxu0 0.0
    %1021 = vmatpush1.msra.mxu0 0.0
    %1022 = vmatprep.subr.mxu0 0.0
    %1023 = vmatpush1.msra.mxu0 0.0
    %1024 = vmatprep.mubr.f32.mxu0 0.0
    %1025 = vmatmul.mubr.f32.gmra.mrb[0].mxu0 %v958
    %v1026 = vpop.f32.mrb[0].mxu0
    %v1027 = vadd.f32 0.0, %v1026
    %v1028 = vpop.f32.mrb[0].mxu0
    %1029 = vdwg.mxu0
    %v1031 = vrot.slane %v1027, 4
    %v1033 = vadd.f32 %v293, %v1031
    %v1034 = vxor.u32 %v1033, 2147483648
    %v1035 = vmul.f32 %v1034, 1.442695
    %v1036 = vpow.pop %v1035
    %v1037 = vadd.f32 %v1036, 1.0
    %v1038 = vrcp.pop %v1037
    %v1039 = vmul.f32 1.0, %v1038
    %v1040 = vtanh.pop %v1033
    %v1042 = vrot.slane %v942, 6
    %v1044 = vmul.f32 %v1039, %v1042
    %1046 = vrot.lane.b32.xlu0 %v1040, 64
    %v1047 = vpop.permute.xlu0 %1046
    %v1049 = vmul.f32 %v1039, %v1047
    %1051 = vrot.lane.b32.xlu0 %v1049, 32
    %v1052 = vpop.permute.xlu0 %1051
    %v1054 = vadd.f32 %v1044, %v1052
    %v1055 = vtanh.pop %v1054
    %1057 = vrot.lane.b32.xlu0 %v1055, 64
    %v1058 = vpop.permute.xlu0 %1057
    %v1060 = vmul.f32 %v1039, %v1058
    %1062 = vrot.lane.b32.xlu0 %v1060, 32
    %v1063 = vpop.permute.xlu0 %1062
    %s1065 = scalar_lea.vmem [#allocation2], 12
    %1066 = vst.msk [vmem:[%s1065 - $0x4] sm:$0x30] %vm622, %v1063
    %v1067 = vrot.slane %v1060, 4
    %1068 = vrot.lane.b32.xlu0 %v1067, 32
    %v1069 = vpop.permute.xlu0 %1068
    %v1070 = vsel %vm296, %v1069, 0
    %1072 = vmatprep.subr.mxu0 0.0
    %1073 = vmatpush1.msra.mxu0 %v165
    %1074 = vmatprep.subr.mxu0 0.0
    %1075 = vmatpush1.msra.mxu0 %v166
    %1076 = vmatprep.subr.mxu0 0.0
    %1077 = vmatpush1.msra.mxu0 %v167
    %1078 = vmatprep.subr.mxu0 0.0
    %1079 = vmatpush1.msra.mxu0 %v168
    %1080 = vmatprep.subr.mxu0 0.0
    %1081 = vmatpush1.msra.mxu0 0.0
    %1082 = vmatprep.subr.mxu0 0.0
    %1083 = vmatpush1.msra.mxu0 0.0
    %1084 = vmatprep.subr.mxu0 0.0
    %1085 = vmatpush1.msra.mxu0 0.0
    %1086 = vmatprep.subr.mxu0 0.0
    %1087 = vmatpush1.msra.mxu0 0.0
    %1088 = vmatprep.subr.mxu0 0.0
    %1089 = vmatpush1.msra.mxu0 0.0
    %1090 = vmatprep.subr.mxu0 0.0
    %1091 = vmatpush1.msra.mxu0 0.0
    %1092 = vmatprep.subr.mxu0 0.0
    %1093 = vmatpush1.msra.mxu0 0.0
    %1094 = vmatprep.subr.mxu0 0.0
    %1095 = vmatpush1.msra.mxu0 0.0
    %1096 = vmatprep.subr.mxu0 0.0
    %1097 = vmatpush1.msra.mxu0 0.0
    %1098 = vmatprep.subr.mxu0 0.0
    %1099 = vmatpush1.msra.mxu0 0.0
    %1100 = vmatprep.subr.mxu0 0.0
    %1101 = vmatpush1.msra.mxu0 0.0
    %1102 = vmatprep.subr.mxu0 0.0
    %1103 = vmatpush1.msra.mxu0 0.0
    %1104 = vmatprep.subr.mxu0 0.0
    %1105 = vmatpush1.msra.mxu0 0.0
    %1106 = vmatprep.subr.mxu0 0.0
    %1107 = vmatpush1.msra.mxu0 0.0
    %1108 = vmatprep.subr.mxu0 0.0
    %1109 = vmatpush1.msra.mxu0 0.0
    %1110 = vmatprep.subr.mxu0 0.0
    %1111 = vmatpush1.msra.mxu0 0.0
    %1112 = vmatprep.subr.mxu0 0.0
    %1113 = vmatpush1.msra.mxu0 0.0
    %1114 = vmatprep.subr.mxu0 0.0
    %1115 = vmatpush1.msra.mxu0 0.0
    %1116 = vmatprep.subr.mxu0 0.0
    %1117 = vmatpush1.msra.mxu0 0.0
    %1118 = vmatprep.subr.mxu0 0.0
    %1119 = vmatpush1.msra.mxu0 0.0
    %1120 = vmatprep.subr.mxu0 0.0
    %1121 = vmatpush1.msra.mxu0 0.0
    %1122 = vmatprep.subr.mxu0 0.0
    %1123 = vmatpush1.msra.mxu0 0.0
    %1124 = vmatprep.subr.mxu0 0.0
    %1125 = vmatpush1.msra.mxu0 0.0
    %1126 = vmatprep.subr.mxu0 0.0
    %1127 = vmatpush1.msra.mxu0 0.0
    %1128 = vmatprep.subr.mxu0 0.0
    %1129 = vmatpush1.msra.mxu0 0.0
    %1130 = vmatprep.subr.mxu0 0.0
    %1131 = vmatpush1.msra.mxu0 0.0
    %1132 = vmatprep.subr.mxu0 0.0
    %1133 = vmatpush1.msra.mxu0 0.0
    %1134 = vmatprep.subr.mxu0 0.0
    %1135 = vmatpush1.msra.mxu0 0.0
    %1136 = vmatprep.mubr.f32.mxu0 0.0
    %1137 = vmatmul.mubr.f32.gmra.mrb[0].mxu0 %v1070
    %v1138 = vpop.f32.mrb[0].mxu0
    %v1139 = vadd.f32 0.0, %v1138
    %v1140 = vpop.f32.mrb[0].mxu0
    %1141 = vdwg.mxu0
    %v1143 = vrot.slane %v1139, 2
    %v1145 = vadd.f32 %v293, %v1143
    %v1146 = vxor.u32 %v1145, 2147483648
    %v1147 = vmul.f32 %v1146, 1.442695
    %v1148 = vpow.pop %v1147
    %v1149 = vadd.f32 %v1148, 1.0
    %v1150 = vrcp.pop %v1149
    %v1151 = vmul.f32 1.0, %v1150
    %v1152 = vtanh.pop %v1145
    %v1154 = vrot.slane %v1054, 6
    %v1156 = vmul.f32 %v1151, %v1154
    %1158 = vrot.lane.b32.xlu0 %v1152, 64
    %v1159 = vpop.permute.xlu0 %1158
    %v1161 = vmul.f32 %v1151, %v1159
    %1163 = vrot.lane.b32.xlu0 %v1161, 32
    %v1164 = vpop.permute.xlu0 %1163
    %v1166 = vadd.f32 %v1156, %v1164
    %v1167 = vtanh.pop %v1166
    %1169 = vrot.lane.b32.xlu0 %v1167, 64
    %v1170 = vpop.permute.xlu0 %1169
    %v1172 = vmul.f32 %v1151, %v1170
    %1174 = vrot.lane.b32.xlu0 %v1172, 32
    %v1175 = vpop.permute.xlu0 %1174
    %s1177 = scalar_lea.vmem [#allocation2], 14
    %1178 = vst.msk [vmem:[%s1177 - $0x6] sm:$0xc0] %vm735, %v1175
    %v1179 = vld [vmem:[#allocation2] sm:$0x3]
    %v1180 = vld [vmem:[#allocation2 + $0x2] sm:$0x3]
    %v1181 = vld [vmem:[#allocation2 + $0x4] sm:$0x3]
    %v1182 = vld [vmem:[#allocation2 + $0x6] sm:$0x3]
    %v1183 = vld [vmem:[#allocation2 + $0x8] sm:$0x3]
    %v1184 = vld [vmem:[#allocation2 + $0xa] sm:$0x3]
    %v1185 = vld [vmem:[#allocation2 + $0xc] sm:$0x3]
    %v1186 = vld [vmem:[#allocation2 + $0xe] sm:$0x3]
    %v1187 = vld [vmem:[#allocation8 + $0x38] sm:$0xff]
    %v1188 = vld [vmem:[#allocation8 + $0x40] sm:$0xff]
    %v1189 = vld [vmem:[#allocation8 + $0x48] sm:$0xff]
    %v1190 = vld [vmem:[#allocation8 + $0x50] sm:$0xff]
    %v1191 = vld [vmem:[#allocation8 + $0x58] sm:$0xff]
    %v1192 = vld [vmem:[#allocation8 + $0x60] sm:$0xff]
    %v1193 = vld [vmem:[#allocation8 + $0x68] sm:$0xff]
    %v1194 = vld [vmem:[#allocation8 + $0x70] sm:$0xff]
    %v1195 = vld [vmem:[#allocation8 + $0x78] sm:$0x1]
    %v1196 = vlaneseq
    %v1197 = vshrl.u32 %v1196, 7
    %v1198 = vsub.s32 0, %v1197
    %v1199 = vrot.slane %v1195, %v1198
    %v1208 = vcombine.low %v1179, %v1180
    %v1209 = vcombine.low %v1181, %v1182
    %v1211 = vunpack.c.l.s4 1983009808
    %v1212 = vunpack.c.0.s8 %v1211
    %v1213 = vlaneseq
    %v1214 = vshrl.u32 %v1213, 7
    %v1215 = vsub.s32 %v1212, %v1214
    %v1216 = vrot.slane %v1208, %v1215
    %v1218 = vunpack.c.l.s4 1983009808
    %v1219 = vunpack.c.0.s8 %v1218
    %v1220 = vlaneseq
    %v1221 = vshrl.u32 %v1220, 7
    %v1222 = vsub.s32 %v1219, %v1221
    %v1223 = vrot.slane %v1209, %v1222
    %v1224 = vcombine.low %v1216, %v1223
    %v1225 = vcombine.low %v1183, %v1184
    %v1226 = vcombine.low %v1185, %v1186
    %v1228 = vunpack.c.l.s4 1983009808
    %v1229 = vunpack.c.0.s8 %v1228
    %v1230 = vlaneseq
    %v1231 = vshrl.u32 %v1230, 7
    %v1232 = vsub.s32 %v1229, %v1231
    %v1233 = vrot.slane %v1225, %v1232
    %v1235 = vunpack.c.l.s4 1983009808
    %v1236 = vunpack.c.0.s8 %v1235
    %v1237 = vlaneseq
    %v1238 = vshrl.u32 %v1237, 7
    %v1239 = vsub.s32 %v1236, %v1238
    %v1240 = vrot.slane %v1226, %v1239
    %v1241 = vcombine.low %v1233, %v1240
    %v1242 = vsel %vm296, %v1224, 0
    %v1244 = vsel %vm296, %v1241, 0
    %1246 = vmatprep.subr.mxu0 0.0
    %1247 = vmatpush1.msra.mxu0 %v1187
    %1248 = vmatprep.subr.mxu0 0.0
    %1249 = vmatpush1.msra.mxu0 %v1188
    %1250 = vmatprep.subr.mxu0 0.0
    %1251 = vmatpush1.msra.mxu0 %v1189
    %1252 = vmatprep.subr.mxu0 0.0
    %1253 = vmatpush1.msra.mxu0 %v1190
    %1254 = vmatprep.subr.mxu0 0.0
    %1255 = vmatpush1.msra.mxu0 0.0
    %1256 = vmatprep.subr.mxu0 0.0
    %1257 = vmatpush1.msra.mxu0 0.0
    %1258 = vmatprep.subr.mxu0 0.0
    %1259 = vmatpush1.msra.mxu0 0.0
    %1260 = vmatprep.subr.mxu0 0.0
    %1261 = vmatpush1.msra.mxu0 0.0
    %1262 = vmatprep.subr.mxu0 0.0
    %1263 = vmatpush1.msra.mxu0 0.0
    %1264 = vmatprep.subr.mxu0 0.0
    %1265 = vmatpush1.msra.mxu0 0.0
    %1266 = vmatprep.subr.mxu0 0.0
    %1267 = vmatpush1.msra.mxu0 0.0
    %1268 = vmatprep.subr.mxu0 0.0
    %1269 = vmatpush1.msra.mxu0 0.0
    %1270 = vmatprep.subr.mxu0 0.0
    %1271 = vmatpush1.msra.mxu0 0.0
    %1272 = vmatprep.subr.mxu0 0.0
    %1273 = vmatpush1.msra.mxu0 0.0
    %1274 = vmatprep.subr.mxu0 0.0
    %1275 = vmatpush1.msra.mxu0 0.0
    %1276 = vmatprep.subr.mxu0 0.0
    %1277 = vmatpush1.msra.mxu0 0.0
    %1278 = vmatprep.subr.mxu0 0.0
    %1279 = vmatpush1.msra.mxu0 0.0
    %1280 = vmatprep.subr.mxu0 0.0
    %1281 = vmatpush1.msra.mxu0 0.0
    %1282 = vmatprep.subr.mxu0 0.0
    %1283 = vmatpush1.msra.mxu0 0.0
    %1284 = vmatprep.subr.mxu0 0.0
    %1285 = vmatpush1.msra.mxu0 0.0
    %1286 = vmatprep.subr.mxu0 0.0
    %1287 = vmatpush1.msra.mxu0 0.0
    %1288 = vmatprep.subr.mxu0 0.0
    %1289 = vmatpush1.msra.mxu0 0.0
    %1290 = vmatprep.subr.mxu0 0.0
    %1291 = vmatpush1.msra.mxu0 0.0
    %1292 = vmatprep.subr.mxu0 0.0
    %1293 = vmatpush1.msra.mxu0 0.0
    %1294 = vmatprep.subr.mxu0 0.0
    %1295 = vmatpush1.msra.mxu0 0.0
    %1296 = vmatprep.subr.mxu0 0.0
    %1297 = vmatpush1.msra.mxu0 0.0
    %1298 = vmatprep.subr.mxu0 0.0
    %1299 = vmatpush1.msra.mxu0 0.0
    %1300 = vmatprep.subr.mxu0 0.0
    %1301 = vmatpush1.msra.mxu0 0.0
    %1302 = vmatprep.subr.mxu0 0.0
    %1303 = vmatpush1.msra.mxu0 0.0
    %1304 = vmatprep.subr.mxu0 0.0
    %1305 = vmatpush1.msra.mxu0 0.0
    %1306 = vmatprep.subr.mxu0 0.0
    %1307 = vmatpush1.msra.mxu0 0.0
    %1308 = vmatprep.subr.mxu0 0.0
    %1309 = vmatpush1.msra.mxu0 0.0
    %1310 = vmatprep.mubr.f32.mxu0 0.0
    %1311 = vmatmul.mubr.f32.gmra.mrb[0].mxu0 %v1242
    %v1312 = vpop.f32.mrb[0].mxu0
    %v1313 = vadd.f32 %v1199, %v1312
    %v1314 = vpop.f32.mrb[0].mxu0
    %1315 = vmatprep.mubr.f32.mxu0 0.0
    %1316 = vmatmul.mubr.f32.gmra.mrb[0].mxu0 %v1244
    %v1317 = vpop.f32.mrb[0].mxu0
    %v1318 = vadd.f32 %v1199, %v1317
    %v1319 = vpop.f32.mrb[0].mxu0
    %1320 = vdwg.mxu0
    %1321 = vmatprep.subr.mxu0 0.0
    %1322 = vmatpush1.msra.mxu0 %v1191
    %1323 = vmatprep.subr.mxu0 0.0
    %1324 = vmatpush1.msra.mxu0 %v1192
    %1325 = vmatprep.subr.mxu0 0.0
    %1326 = vmatpush1.msra.mxu0 %v1193
    %1327 = vmatprep.subr.mxu0 0.0
    %1328 = vmatpush1.msra.mxu0 %v1194
    %1329 = vmatprep.subr.mxu0 0.0
    %1330 = vmatpush1.msra.mxu0 0.0
    %1331 = vmatprep.subr.mxu0 0.0
    %1332 = vmatpush1.msra.mxu0 0.0
    %1333 = vmatprep.subr.mxu0 0.0
    %1334 = vmatpush1.msra.mxu0 0.0
    %1335 = vmatprep.subr.mxu0 0.0
    %1336 = vmatpush1.msra.mxu0 0.0
    %1337 = vmatprep.subr.mxu0 0.0
    %1338 = vmatpush1.msra.mxu0 0.0
    %1339 = vmatprep.subr.mxu0 0.0
    %1340 = vmatpush1.msra.mxu0 0.0
    %1341 = vmatprep.subr.mxu0 0.0
    %1342 = vmatpush1.msra.mxu0 0.0
    %1343 = vmatprep.subr.mxu0 0.0
    %1344 = vmatpush1.msra.mxu0 0.0
    %1345 = vmatprep.subr.mxu0 0.0
    %1346 = vmatpush1.msra.mxu0 0.0
    %1347 = vmatprep.subr.mxu0 0.0
    %1348 = vmatpush1.msra.mxu0 0.0
    %1349 = vmatprep.subr.mxu0 0.0
    %1350 = vmatpush1.msra.mxu0 0.0
    %1351 = vmatprep.subr.mxu0 0.0
    %1352 = vmatpush1.msra.mxu0 0.0
    %1353 = vmatprep.subr.mxu0 0.0
    %1354 = vmatpush1.msra.mxu0 0.0
    %1355 = vmatprep.subr.mxu0 0.0
    %1356 = vmatpush1.msra.mxu0 0.0
    %1357 = vmatprep.subr.mxu0 0.0
    %1358 = vmatpush1.msra.mxu0 0.0
    %1359 = vmatprep.subr.mxu0 0.0
    %1360 = vmatpush1.msra.mxu0 0.0
    %1361 = vmatprep.subr.mxu0 0.0
    %1362 = vmatpush1.msra.mxu0 0.0
    %1363 = vmatprep.subr.mxu0 0.0
    %1364 = vmatpush1.msra.mxu0 0.0
    %1365 = vmatprep.subr.mxu0 0.0
    %1366 = vmatpush1.msra.mxu0 0.0
    %1367 = vmatprep.subr.mxu0 0.0
    %1368 = vmatpush1.msra.mxu0 0.0
    %1369 = vmatprep.subr.mxu0 0.0
    %1370 = vmatpush1.msra.mxu0 0.0
    %1371 = vmatprep.subr.mxu0 0.0
    %1372 = vmatpush1.msra.mxu0 0.0
    %1373 = vmatprep.subr.mxu0 0.0
    %1374 = vmatpush1.msra.mxu0 0.0
    %1375 = vmatprep.subr.mxu0 0.0
    %1376 = vmatpush1.msra.mxu0 0.0
    %1377 = vmatprep.subr.mxu0 0.0
    %1378 = vmatpush1.msra.mxu0 0.0
    %1379 = vmatprep.subr.mxu0 0.0
    %1380 = vmatpush1.msra.mxu0 0.0
    %1381 = vmatprep.subr.mxu0 0.0
    %1382 = vmatpush1.msra.mxu0 0.0
    %1383 = vmatprep.subr.mxu0 0.0
    %1384 = vmatpush1.msra.mxu0 0.0
    %1385 = vmatprep.mubr.f32.mxu0 0.0
    %1386 = vmatmul.mubr.f32.gmra.mrb[0].mxu0 %v298
    %v1387 = vpop.f32.mrb[0].mxu0
    %v1388 = vadd.f32 0.0, %v1387
    %v1389 = vpop.f32.mrb[0].mxu0
    %1390 = vdwg.mxu0
    %v1391 = vadd.f32 %v1313, %v1388
    %v1392 = vxor.u32 %v1391, 2147483648
    %v1393 = vmul.f32 %v1392, 1.442695
    %v1394 = vpow.pop %v1393
    %v1395 = vadd.f32 %v1394, 1.0
    %v1396 = vrcp.pop %v1395
    %v1397 = vmul.f32 1.0, %v1396
    %v1398 = vtanh.pop %v1391
    %v1399 = vmul.f32 %v1397, 0.0
    %1401 = vrot.lane.b32.xlu0 %v1398, 64
    %v1402 = vpop.permute.xlu0 %1401
    %v1404 = vmul.f32 %v1397, %v1402
    %1406 = vrot.lane.b32.xlu0 %v1404, 32
    %v1407 = vpop.permute.xlu0 %1406
    %v1409 = vadd.f32 %v1399, %v1407
    %v1410 = vtanh.pop %v1409
    %1412 = vrot.lane.b32.xlu0 %v1410, 64
    %v1413 = vpop.permute.xlu0 %1412
    %v1415 = vmul.f32 %v1397, %v1413
    %1417 = vrot.lane.b32.xlu0 %v1415, 32
    %v1418 = vpop.permute.xlu0 %1417
    %1420 = vst.msk [vmem:[#allocation2] sm:$0x3] %vm399, %v1418
    %v1421 = vsel %vm296, %v1418, 0
    %1423 = vmatprep.subr.mxu0 0.0
    %1424 = vmatpush1.msra.mxu0 %v1191
    %1425 = vmatprep.subr.mxu0 0.0
    %1426 = vmatpush1.msra.mxu0 %v1192
    %1427 = vmatprep.subr.mxu0 0.0
    %1428 = vmatpush1.msra.mxu0 %v1193
    %1429 = vmatprep.subr.mxu0 0.0
    %1430 = vmatpush1.msra.mxu0 %v1194
    %1431 = vmatprep.subr.mxu0 0.0
    %1432 = vmatpush1.msra.mxu0 0.0
    %1433 = vmatprep.subr.mxu0 0.0
    %1434 = vmatpush1.msra.mxu0 0.0
    %1435 = vmatprep.subr.mxu0 0.0
    %1436 = vmatpush1.msra.mxu0 0.0
    %1437 = vmatprep.subr.mxu0 0.0
    %1438 = vmatpush1.msra.mxu0 0.0
    %1439 = vmatprep.subr.mxu0 0.0
    %1440 = vmatpush1.msra.mxu0 0.0
    %1441 = vmatprep.subr.mxu0 0.0
    %1442 = vmatpush1.msra.mxu0 0.0
    %1443 = vmatprep.subr.mxu0 0.0
    %1444 = vmatpush1.msra.mxu0 0.0
    %1445 = vmatprep.subr.mxu0 0.0
    %1446 = vmatpush1.msra.mxu0 0.0
    %1447 = vmatprep.subr.mxu0 0.0
    %1448 = vmatpush1.msra.mxu0 0.0
    %1449 = vmatprep.subr.mxu0 0.0
    %1450 = vmatpush1.msra.mxu0 0.0
    %1451 = vmatprep.subr.mxu0 0.0
    %1452 = vmatpush1.msra.mxu0 0.0
    %1453 = vmatprep.subr.mxu0 0.0
    %1454 = vmatpush1.msra.mxu0 0.0
    %1455 = vmatprep.subr.mxu0 0.0
    %1456 = vmatpush1.msra.mxu0 0.0
    %1457 = vmatprep.subr.mxu0 0.0
    %1458 = vmatpush1.msra.mxu0 0.0
    %1459 = vmatprep.subr.mxu0 0.0
    %1460 = vmatpush1.msra.mxu0 0.0
    %1461 = vmatprep.subr.mxu0 0.0
    %1462 = vmatpush1.msra.mxu0 0.0
    %1463 = vmatprep.subr.mxu0 0.0
    %1464 = vmatpush1.msra.mxu0 0.0
    %1465 = vmatprep.subr.mxu0 0.0
    %1466 = vmatpush1.msra.mxu0 0.0
    %1467 = vmatprep.subr.mxu0 0.0
    %1468 = vmatpush1.msra.mxu0 0.0
    %1469 = vmatprep.subr.mxu0 0.0
    %1470 = vmatpush1.msra.mxu0 0.0
    %1471 = vmatprep.subr.mxu0 0.0
    %1472 = vmatpush1.msra.mxu0 0.0
    %1473 = vmatprep.subr.mxu0 0.0
    %1474 = vmatpush1.msra.mxu0 0.0
    %1475 = vmatprep.subr.mxu0 0.0
    %1476 = vmatpush1.msra.mxu0 0.0
    %1477 = vmatprep.subr.mxu0 0.0
    %1478 = vmatpush1.msra.mxu0 0.0
    %1479 = vmatprep.subr.mxu0 0.0
    %1480 = vmatpush1.msra.mxu0 0.0
    %1481 = vmatprep.subr.mxu0 0.0
    %1482 = vmatpush1.msra.mxu0 0.0
    %1483 = vmatprep.subr.mxu0 0.0
    %1484 = vmatpush1.msra.mxu0 0.0
    %1485 = vmatprep.subr.mxu0 0.0
    %1486 = vmatpush1.msra.mxu0 0.0
    %1487 = vmatprep.mubr.f32.mxu0 0.0
    %1488 = vmatmul.mubr.f32.gmra.mrb[0].mxu0 %v1421
    %v1489 = vpop.f32.mrb[0].mxu0
    %v1490 = vadd.f32 0.0, %v1489
    %v1491 = vpop.f32.mrb[0].mxu0
    %1492 = vdwg.mxu0
    %v1494 = vrot.slane %v1490, 6
    %v1496 = vadd.f32 %v1313, %v1494
    %v1497 = vxor.u32 %v1496, 2147483648
    %v1498 = vmul.f32 %v1497, 1.442695
    %v1499 = vpow.pop %v1498
    %v1500 = vadd.f32 %v1499, 1.0
    %v1501 = vrcp.pop %v1500
    %v1502 = vmul.f32 1.0, %v1501
    %v1503 = vtanh.pop %v1496
    %v1505 = vrot.slane %v1409, 6
    %v1507 = vmul.f32 %v1502, %v1505
    %1509 = vrot.lane.b32.xlu0 %v1503, 64
    %v1510 = vpop.permute.xlu0 %1509
    %v1512 = vmul.f32 %v1502, %v1510
    %1514 = vrot.lane.b32.xlu0 %v1512, 32
    %v1515 = vpop.permute.xlu0 %1514
    %v1517 = vadd.f32 %v1507, %v1515
    %v1518 = vtanh.pop %v1517
    %1520 = vrot.lane.b32.xlu0 %v1518, 64
    %v1521 = vpop.permute.xlu0 %1520
    %v1523 = vmul.f32 %v1502, %v1521
    %1525 = vrot.lane.b32.xlu0 %v1523, 32
    %v1526 = vpop.permute.xlu0 %1525
    %1528 = vst.msk [vmem:[%s508 - $0x2] sm:$0xc] %vm509, %v1526
    %v1529 = vrot.slane %v1523, 2
    %1530 = vrot.lane.b32.xlu0 %v1529, 32
    %v1531 = vpop.permute.xlu0 %1530
    %v1532 = vsel %vm296, %v1531, 0
    %1534 = vmatprep.subr.mxu0 0.0
    %1535 = vmatpush1.msra.mxu0 %v1191
    %1536 = vmatprep.subr.mxu0 0.0
    %1537 = vmatpush1.msra.mxu0 %v1192
    %1538 = vmatprep.subr.mxu0 0.0
    %1539 = vmatpush1.msra.mxu0 %v1193
    %1540 = vmatprep.subr.mxu0 0.0
    %1541 = vmatpush1.msra.mxu0 %v1194
    %1542 = vmatprep.subr.mxu0 0.0
    %1543 = vmatpush1.msra.mxu0 0.0
    %1544 = vmatprep.subr.mxu0 0.0
    %1545 = vmatpush1.msra.mxu0 0.0
    %1546 = vmatprep.subr.mxu0 0.0
    %1547 = vmatpush1.msra.mxu0 0.0
    %1548 = vmatprep.subr.mxu0 0.0
    %1549 = vmatpush1.msra.mxu0 0.0
    %1550 = vmatprep.subr.mxu0 0.0
    %1551 = vmatpush1.msra.mxu0 0.0
    %1552 = vmatprep.subr.mxu0 0.0
    %1553 = vmatpush1.msra.mxu0 0.0
    %1554 = vmatprep.subr.mxu0 0.0
    %1555 = vmatpush1.msra.mxu0 0.0
    %1556 = vmatprep.subr.mxu0 0.0
    %1557 = vmatpush1.msra.mxu0 0.0
    %1558 = vmatprep.subr.mxu0 0.0
    %1559 = vmatpush1.msra.mxu0 0.0
    %1560 = vmatprep.subr.mxu0 0.0
    %1561 = vmatpush1.msra.mxu0 0.0
    %1562 = vmatprep.subr.mxu0 0.0
    %1563 = vmatpush1.msra.mxu0 0.0
    %1564 = vmatprep.subr.mxu0 0.0
    %1565 = vmatpush1.msra.mxu0 0.0
    %1566 = vmatprep.subr.mxu0 0.0
    %1567 = vmatpush1.msra.mxu0 0.0
    %1568 = vmatprep.subr.mxu0 0.0
    %1569 = vmatpush1.msra.mxu0 0.0
    %1570 = vmatprep.subr.mxu0 0.0
    %1571 = vmatpush1.msra.mxu0 0.0
    %1572 = vmatprep.subr.mxu0 0.0
    %1573 = vmatpush1.msra.mxu0 0.0
    %1574 = vmatprep.subr.mxu0 0.0
    %1575 = vmatpush1.msra.mxu0 0.0
    %1576 = vmatprep.subr.mxu0 0.0
    %1577 = vmatpush1.msra.mxu0 0.0
    %1578 = vmatprep.subr.mxu0 0.0
    %1579 = vmatpush1.msra.mxu0 0.0
    %1580 = vmatprep.subr.mxu0 0.0
    %1581 = vmatpush1.msra.mxu0 0.0
    %1582 = vmatprep.subr.mxu0 0.0
    %1583 = vmatpush1.msra.mxu0 0.0
    %1584 = vmatprep.subr.mxu0 0.0
    %1585 = vmatpush1.msra.mxu0 0.0
    %1586 = vmatprep.subr.mxu0 0.0
    %1587 = vmatpush1.msra.mxu0 0.0
    %1588 = vmatprep.subr.mxu0 0.0
    %1589 = vmatpush1.msra.mxu0 0.0
    %1590 = vmatprep.subr.mxu0 0.0
    %1591 = vmatpush1.msra.mxu0 0.0
    %1592 = vmatprep.subr.mxu0 0.0
    %1593 = vmatpush1.msra.mxu0 0.0
    %1594 = vmatprep.subr.mxu0 0.0
    %1595 = vmatpush1.msra.mxu0 0.0
    %1596 = vmatprep.subr.mxu0 0.0
    %1597 = vmatpush1.msra.mxu0 0.0
    %1598 = vmatprep.mubr.f32.mxu0 0.0
    %1599 = vmatmul.mubr.f32.gmra.mrb[0].mxu0 %v1532
    %v1600 = vpop.f32.mrb[0].mxu0
    %v1601 = vadd.f32 0.0, %v1600
    %v1602 = vpop.f32.mrb[0].mxu0
    %1603 = vdwg.mxu0
    %v1605 = vrot.slane %v1601, 4
    %v1607 = vadd.f32 %v1313, %v1605
    %v1608 = vxor.u32 %v1607, 2147483648
    %v1609 = vmul.f32 %v1608, 1.442695
    %v1610 = vpow.pop %v1609
    %v1611 = vadd.f32 %v1610, 1.0
    %v1612 = vrcp.pop %v1611
    %v1613 = vmul.f32 1.0, %v1612
    %v1614 = vtanh.pop %v1607
    %v1616 = vrot.slane %v1517, 6
    %v1618 = vmul.f32 %v1613, %v1616
    %1620 = vrot.lane.b32.xlu0 %v1614, 64
    %v1621 = vpop.permute.xlu0 %1620
    %v1623 = vmul.f32 %v1613, %v1621
    %1625 = vrot.lane.b32.xlu0 %v1623, 32
    %v1626 = vpop.permute.xlu0 %1625
    %v1628 = vadd.f32 %v1618, %v1626
    %v1629 = vtanh.pop %v1628
    %1631 = vrot.lane.b32.xlu0 %v1629, 64
    %v1632 = vpop.permute.xlu0 %1631
    %v1634 = vmul.f32 %v1613, %v1632
    %1636 = vrot.lane.b32.xlu0 %v1634, 32
    %v1637 = vpop.permute.xlu0 %1636
    %1639 = vst.msk [vmem:[%s621 - $0x4] sm:$0x30] %vm622, %v1637
    %v1640 = vrot.slane %v1634, 4
    %1641 = vrot.lane.b32.xlu0 %v1640, 32
    %v1642 = vpop.permute.xlu0 %1641
    %v1643 = vsel %vm296, %v1642, 0
    %1645 = vmatprep.subr.mxu0 0.0
    %1646 = vmatpush1.msra.mxu0 %v1191
    %1647 = vmatprep.subr.mxu0 0.0
    %1648 = vmatpush1.msra.mxu0 %v1192
    %1649 = vmatprep.subr.mxu0 0.0
    %1650 = vmatpush1.msra.mxu0 %v1193
    %1651 = vmatprep.subr.mxu0 0.0
    %1652 = vmatpush1.msra.mxu0 %v1194
    %1653 = vmatprep.subr.mxu0 0.0
    %1654 = vmatpush1.msra.mxu0 0.0
    %1655 = vmatprep.subr.mxu0 0.0
    %1656 = vmatpush1.msra.mxu0 0.0
    %1657 = vmatprep.subr.mxu0 0.0
    %1658 = vmatpush1.msra.mxu0 0.0
    %1659 = vmatprep.subr.mxu0 0.0
    %1660 = vmatpush1.msra.mxu0 0.0
    %1661 = vmatprep.subr.mxu0 0.0
    %1662 = vmatpush1.msra.mxu0 0.0
    %1663 = vmatprep.subr.mxu0 0.0
    %1664 = vmatpush1.msra.mxu0 0.0
    %1665 = vmatprep.subr.mxu0 0.0
    %1666 = vmatpush1.msra.mxu0 0.0
    %1667 = vmatprep.subr.mxu0 0.0
    %1668 = vmatpush1.msra.mxu0 0.0
    %1669 = vmatprep.subr.mxu0 0.0
    %1670 = vmatpush1.msra.mxu0 0.0
    %1671 = vmatprep.subr.mxu0 0.0
    %1672 = vmatpush1.msra.mxu0 0.0
    %1673 = vmatprep.subr.mxu0 0.0
    %1674 = vmatpush1.msra.mxu0 0.0
    %1675 = vmatprep.subr.mxu0 0.0
    %1676 = vmatpush1.msra.mxu0 0.0
    %1677 = vmatprep.subr.mxu0 0.0
    %1678 = vmatpush1.msra.mxu0 0.0
    %1679 = vmatprep.subr.mxu0 0.0
    %1680 = vmatpush1.msra.mxu0 0.0
    %1681 = vmatprep.subr.mxu0 0.0
    %1682 = vmatpush1.msra.mxu0 0.0
    %1683 = vmatprep.subr.mxu0 0.0
    %1684 = vmatpush1.msra.mxu0 0.0
    %1685 = vmatprep.subr.mxu0 0.0
    %1686 = vmatpush1.msra.mxu0 0.0
    %1687 = vmatprep.subr.mxu0 0.0
    %1688 = vmatpush1.msra.mxu0 0.0
    %1689 = vmatprep.subr.mxu0 0.0
    %1690 = vmatpush1.msra.mxu0 0.0
    %1691 = vmatprep.subr.mxu0 0.0
    %1692 = vmatpush1.msra.mxu0 0.0
    %1693 = vmatprep.subr.mxu0 0.0
    %1694 = vmatpush1.msra.mxu0 0.0
    %1695 = vmatprep.subr.mxu0 0.0
    %1696 = vmatpush1.msra.mxu0 0.0
    %1697 = vmatprep.subr.mxu0 0.0
    %1698 = vmatpush1.msra.mxu0 0.0
    %1699 = vmatprep.subr.mxu0 0.0
    %1700 = vmatpush1.msra.mxu0 0.0
    %1701 = vmatprep.subr.mxu0 0.0
    %1702 = vmatpush1.msra.mxu0 0.0
    %1703 = vmatprep.subr.mxu0 0.0
    %1704 = vmatpush1.msra.mxu0 0.0
    %1705 = vmatprep.subr.mxu0 0.0
    %1706 = vmatpush1.msra.mxu0 0.0
    %1707 = vmatprep.subr.mxu0 0.0
    %1708 = vmatpush1.msra.mxu0 0.0
    %1709 = vmatprep.mubr.f32.mxu0 0.0
    %1710 = vmatmul.mubr.f32.gmra.mrb[0].mxu0 %v1643
    %v1711 = vpop.f32.mrb[0].mxu0
    %v1712 = vadd.f32 0.0, %v1711
    %v1713 = vpop.f32.mrb[0].mxu0
    %1714 = vdwg.mxu0
    %v1716 = vrot.slane %v1712, 2
    %v1718 = vadd.f32 %v1313, %v1716
    %v1719 = vxor.u32 %v1718, 2147483648
    %v1720 = vmul.f32 %v1719, 1.442695
    %v1721 = vpow.pop %v1720
    %v1722 = vadd.f32 %v1721, 1.0
    %v1723 = vrcp.pop %v1722
    %v1724 = vmul.f32 1.0, %v1723
    %v1725 = vtanh.pop %v1718
    %v1727 = vrot.slane %v1628, 6
    %v1729 = vmul.f32 %v1724, %v1727
    %1731 = vrot.lane.b32.xlu0 %v1725, 64
    %v1732 = vpop.permute.xlu0 %1731
    %v1734 = vmul.f32 %v1724, %v1732
    %1736 = vrot.lane.b32.xlu0 %v1734, 32
    %v1737 = vpop.permute.xlu0 %1736
    %v1739 = vadd.f32 %v1729, %v1737
    %v1740 = vtanh.pop %v1739
    %1742 = vrot.lane.b32.xlu0 %v1740, 64
    %v1743 = vpop.permute.xlu0 %1742
    %v1745 = vmul.f32 %v1724, %v1743
    %1747 = vrot.lane.b32.xlu0 %v1745, 32
    %v1748 = vpop.permute.xlu0 %1747
    %1750 = vst.msk [vmem:[%s734 - $0x6] sm:$0xc0] %vm735, %v1748
    %v1751 = vrot.slane %v1745, 6
    %1752 = vrot.lane.b32.xlu0 %v1751, 32
    %v1753 = vpop.permute.xlu0 %1752
    %v1754 = vsel %vm296, %v1753, 0
    %1756 = vmatprep.subr.mxu0 0.0
    %1757 = vmatpush1.msra.mxu0 %v1191
    %1758 = vmatprep.subr.mxu0 0.0
    %1759 = vmatpush1.msra.mxu0 %v1192
    %1760 = vmatprep.subr.mxu0 0.0
    %1761 = vmatpush1.msra.mxu0 %v1193
    %1762 = vmatprep.subr.mxu0 0.0
    %1763 = vmatpush1.msra.mxu0 %v1194
    %1764 = vmatprep.subr.mxu0 0.0
    %1765 = vmatpush1.msra.mxu0 0.0
    %1766 = vmatprep.subr.mxu0 0.0
    %1767 = vmatpush1.msra.mxu0 0.0
    %1768 = vmatprep.subr.mxu0 0.0
    %1769 = vmatpush1.msra.mxu0 0.0
    %1770 = vmatprep.subr.mxu0 0.0
    %1771 = vmatpush1.msra.mxu0 0.0
    %1772 = vmatprep.subr.mxu0 0.0
    %1773 = vmatpush1.msra.mxu0 0.0
    %1774 = vmatprep.subr.mxu0 0.0
    %1775 = vmatpush1.msra.mxu0 0.0
    %1776 = vmatprep.subr.mxu0 0.0
    %1777 = vmatpush1.msra.mxu0 0.0
    %1778 = vmatprep.subr.mxu0 0.0
    %1779 = vmatpush1.msra.mxu0 0.0
    %1780 = vmatprep.subr.mxu0 0.0
    %1781 = vmatpush1.msra.mxu0 0.0
    %1782 = vmatprep.subr.mxu0 0.0
    %1783 = vmatpush1.msra.mxu0 0.0
    %1784 = vmatprep.subr.mxu0 0.0
    %1785 = vmatpush1.msra.mxu0 0.0
    %1786 = vmatprep.subr.mxu0 0.0
    %1787 = vmatpush1.msra.mxu0 0.0
    %1788 = vmatprep.subr.mxu0 0.0
    %1789 = vmatpush1.msra.mxu0 0.0
    %1790 = vmatprep.subr.mxu0 0.0
    %1791 = vmatpush1.msra.mxu0 0.0
    %1792 = vmatprep.subr.mxu0 0.0
    %1793 = vmatpush1.msra.mxu0 0.0
    %1794 = vmatprep.subr.mxu0 0.0
    %1795 = vmatpush1.msra.mxu0 0.0
    %1796 = vmatprep.subr.mxu0 0.0
    %1797 = vmatpush1.msra.mxu0 0.0
    %1798 = vmatprep.subr.mxu0 0.0
    %1799 = vmatpush1.msra.mxu0 0.0
    %1800 = vmatprep.subr.mxu0 0.0
    %1801 = vmatpush1.msra.mxu0 0.0
    %1802 = vmatprep.subr.mxu0 0.0
    %1803 = vmatpush1.msra.mxu0 0.0
    %1804 = vmatprep.subr.mxu0 0.0
    %1805 = vmatpush1.msra.mxu0 0.0
    %1806 = vmatprep.subr.mxu0 0.0
    %1807 = vmatpush1.msra.mxu0 0.0
    %1808 = vmatprep.subr.mxu0 0.0
    %1809 = vmatpush1.msra.mxu0 0.0
    %1810 = vmatprep.subr.mxu0 0.0
    %1811 = vmatpush1.msra.mxu0 0.0
    %1812 = vmatprep.subr.mxu0 0.0
    %1813 = vmatpush1.msra.mxu0 0.0
    %1814 = vmatprep.subr.mxu0 0.0
    %1815 = vmatpush1.msra.mxu0 0.0
    %1816 = vmatprep.subr.mxu0 0.0
    %1817 = vmatpush1.msra.mxu0 0.0
    %1818 = vmatprep.subr.mxu0 0.0
    %1819 = vmatpush1.msra.mxu0 0.0
    %1820 = vmatprep.mubr.f32.mxu0 0.0
    %1821 = vmatmul.mubr.f32.gmra.mrb[0].mxu0 %v1754
    %v1822 = vpop.f32.mrb[0].mxu0
    %v1823 = vadd.f32 0.0, %v1822
    %v1824 = vpop.f32.mrb[0].mxu0
    %1825 = vdwg.mxu0
    %v1826 = vadd.f32 %v1318, %v1823
    %v1827 = vxor.u32 %v1826, 2147483648
    %v1828 = vmul.f32 %v1827, 1.442695
    %v1829 = vpow.pop %v1828
    %v1830 = vadd.f32 %v1829, 1.0
    %v1831 = vrcp.pop %v1830
    %v1832 = vmul.f32 1.0, %v1831
    %v1833 = vtanh.pop %v1826
    %v1835 = vrot.slane %v1739, 6
    %v1837 = vmul.f32 %v1832, %v1835
    %1839 = vrot.lane.b32.xlu0 %v1833, 64
    %v1840 = vpop.permute.xlu0 %1839
    %v1842 = vmul.f32 %v1832, %v1840
    %1844 = vrot.lane.b32.xlu0 %v1842, 32
    %v1845 = vpop.permute.xlu0 %1844
    %v1847 = vadd.f32 %v1837, %v1845
    %v1848 = vtanh.pop %v1847
    %1850 = vrot.lane.b32.xlu0 %v1848, 64
    %v1851 = vpop.permute.xlu0 %1850
    %v1853 = vmul.f32 %v1832, %v1851
    %1855 = vrot.lane.b32.xlu0 %v1853, 32
    %v1856 = vpop.permute.xlu0 %1855
    %1858 = vst.msk [vmem:[%s844] sm:$0x3] %vm399, %v1856
    %v1859 = vsel %vm296, %v1856, 0
    %1861 = vmatprep.subr.mxu0 0.0
    %1862 = vmatpush1.msra.mxu0 %v1191
    %1863 = vmatprep.subr.mxu0 0.0
    %1864 = vmatpush1.msra.mxu0 %v1192
    %1865 = vmatprep.subr.mxu0 0.0
    %1866 = vmatpush1.msra.mxu0 %v1193
    %1867 = vmatprep.subr.mxu0 0.0
    %1868 = vmatpush1.msra.mxu0 %v1194
    %1869 = vmatprep.subr.mxu0 0.0
    %1870 = vmatpush1.msra.mxu0 0.0
    %1871 = vmatprep.subr.mxu0 0.0
    %1872 = vmatpush1.msra.mxu0 0.0
    %1873 = vmatprep.subr.mxu0 0.0
    %1874 = vmatpush1.msra.mxu0 0.0
    %1875 = vmatprep.subr.mxu0 0.0
    %1876 = vmatpush1.msra.mxu0 0.0
    %1877 = vmatprep.subr.mxu0 0.0
    %1878 = vmatpush1.msra.mxu0 0.0
    %1879 = vmatprep.subr.mxu0 0.0
    %1880 = vmatpush1.msra.mxu0 0.0
    %1881 = vmatprep.subr.mxu0 0.0
    %1882 = vmatpush1.msra.mxu0 0.0
    %1883 = vmatprep.subr.mxu0 0.0
    %1884 = vmatpush1.msra.mxu0 0.0
    %1885 = vmatprep.subr.mxu0 0.0
    %1886 = vmatpush1.msra.mxu0 0.0
    %1887 = vmatprep.subr.mxu0 0.0
    %1888 = vmatpush1.msra.mxu0 0.0
    %1889 = vmatprep.subr.mxu0 0.0
    %1890 = vmatpush1.msra.mxu0 0.0
    %1891 = vmatprep.subr.mxu0 0.0
    %1892 = vmatpush1.msra.mxu0 0.0
    %1893 = vmatprep.subr.mxu0 0.0
    %1894 = vmatpush1.msra.mxu0 0.0
    %1895 = vmatprep.subr.mxu0 0.0
    %1896 = vmatpush1.msra.mxu0 0.0
    %1897 = vmatprep.subr.mxu0 0.0
    %1898 = vmatpush1.msra.mxu0 0.0
    %1899 = vmatprep.subr.mxu0 0.0
    %1900 = vmatpush1.msra.mxu0 0.0
    %1901 = vmatprep.subr.mxu0 0.0
    %1902 = vmatpush1.msra.mxu0 0.0
    %1903 = vmatprep.subr.mxu0 0.0
    %1904 = vmatpush1.msra.mxu0 0.0
    %1905 = vmatprep.subr.mxu0 0.0
    %1906 = vmatpush1.msra.mxu0 0.0
    %1907 = vmatprep.subr.mxu0 0.0
    %1908 = vmatpush1.msra.mxu0 0.0
    %1909 = vmatprep.subr.mxu0 0.0
    %1910 = vmatpush1.msra.mxu0 0.0
    %1911 = vmatprep.subr.mxu0 0.0
    %1912 = vmatpush1.msra.mxu0 0.0
    %1913 = vmatprep.subr.mxu0 0.0
    %1914 = vmatpush1.msra.mxu0 0.0
    %1915 = vmatprep.subr.mxu0 0.0
    %1916 = vmatpush1.msra.mxu0 0.0
    %1917 = vmatprep.subr.mxu0 0.0
    %1918 = vmatpush1.msra.mxu0 0.0
    %1919 = vmatprep.subr.mxu0 0.0
    %1920 = vmatpush1.msra.mxu0 0.0
    %1921 = vmatprep.subr.mxu0 0.0
    %1922 = vmatpush1.msra.mxu0 0.0
    %1923 = vmatprep.subr.mxu0 0.0
    %1924 = vmatpush1.msra.mxu0 0.0
    %1925 = vmatprep.mubr.f32.mxu0 0.0
    %1926 = vmatmul.mubr.f32.gmra.mrb[0].mxu0 %v1859
    %v1927 = vpop.f32.mrb[0].mxu0
    %v1928 = vadd.f32 0.0, %v1927
    %v1929 = vpop.f32.mrb[0].mxu0
    %1930 = vdwg.mxu0
    %v1932 = vrot.slane %v1928, 6
    %v1934 = vadd.f32 %v1318, %v1932
    %v1935 = vxor.u32 %v1934, 2147483648
    %v1936 = vmul.f32 %v1935, 1.442695
    %v1937 = vpow.pop %v1936
    %v1938 = vadd.f32 %v1937, 1.0
    %v1939 = vrcp.pop %v1938
    %v1940 = vmul.f32 1.0, %v1939
    %v1941 = vtanh.pop %v1934
    %v1943 = vrot.slane %v1847, 6
    %v1945 = vmul.f32 %v1940, %v1943
    %1947 = vrot.lane.b32.xlu0 %v1941, 64
    %v1948 = vpop.permute.xlu0 %1947
    %v1950 = vmul.f32 %v1940, %v1948
    %1952 = vrot.lane.b32.xlu0 %v1950, 32
    %v1953 = vpop.permute.xlu0 %1952
    %v1955 = vadd.f32 %v1945, %v1953
    %v1956 = vtanh.pop %v1955
    %1958 = vrot.lane.b32.xlu0 %v1956, 64
    %v1959 = vpop.permute.xlu0 %1958
    %v1961 = vmul.f32 %v1940, %v1959
    %1963 = vrot.lane.b32.xlu0 %v1961, 32
    %v1964 = vpop.permute.xlu0 %1963
    %1966 = vst.msk [vmem:[%s953 - $0x2] sm:$0xc] %vm509, %v1964
    %v1967 = vrot.slane %v1961, 2
    %1968 = vrot.lane.b32.xlu0 %v1967, 32
    %v1969 = vpop.permute.xlu0 %1968
    %v1970 = vsel %vm296, %v1969, 0
    %1972 = vmatprep.subr.mxu0 0.0
    %1973 = vmatpush1.msra.mxu0 %v1191
    %1974 = vmatprep.subr.mxu0 0.0
    %1975 = vmatpush1.msra.mxu0 %v1192
    %1976 = vmatprep.subr.mxu0 0.0
    %1977 = vmatpush1.msra.mxu0 %v1193
    %1978 = vmatprep.subr.mxu0 0.0
    %1979 = vmatpush1.msra.mxu0 %v1194
    %1980 = vmatprep.subr.mxu0 0.0
    %1981 = vmatpush1.msra.mxu0 0.0
    %1982 = vmatprep.subr.mxu0 0.0
    %1983 = vmatpush1.msra.mxu0 0.0
    %1984 = vmatprep.subr.mxu0 0.0
    %1985 = vmatpush1.msra.mxu0 0.0
    %1986 = vmatprep.subr.mxu0 0.0
    %1987 = vmatpush1.msra.mxu0 0.0
    %1988 = vmatprep.subr.mxu0 0.0
    %1989 = vmatpush1.msra.mxu0 0.0
    %1990 = vmatprep.subr.mxu0 0.0
    %1991 = vmatpush1.msra.mxu0 0.0
    %1992 = vmatprep.subr.mxu0 0.0
    %1993 = vmatpush1.msra.mxu0 0.0
    %1994 = vmatprep.subr.mxu0 0.0
    %1995 = vmatpush1.msra.mxu0 0.0
    %1996 = vmatprep.subr.mxu0 0.0
    %1997 = vmatpush1.msra.mxu0 0.0
    %1998 = vmatprep.subr.mxu0 0.0
    %1999 = vmatpush1.msra.mxu0 0.0
    %2000 = vmatprep.subr.mxu0 0.0
    %2001 = vmatpush1.msra.mxu0 0.0
    %2002 = vmatprep.subr.mxu0 0.0
    %2003 = vmatpush1.msra.mxu0 0.0
    %2004 = vmatprep.subr.mxu0 0.0
    %2005 = vmatpush1.msra.mxu0 0.0
    %2006 = vmatprep.subr.mxu0 0.0
    %2007 = vmatpush1.msra.mxu0 0.0
    %2008 = vmatprep.subr.mxu0 0.0
    %2009 = vmatpush1.msra.mxu0 0.0
    %2010 = vmatprep.subr.mxu0 0.0
    %2011 = vmatpush1.msra.mxu0 0.0
    %2012 = vmatprep.subr.mxu0 0.0
    %2013 = vmatpush1.msra.mxu0 0.0
    %2014 = vmatprep.subr.mxu0 0.0
    %2015 = vmatpush1.msra.mxu0 0.0
    %2016 = vmatprep.subr.mxu0 0.0
    %2017 = vmatpush1.msra.mxu0 0.0
    %2018 = vmatprep.subr.mxu0 0.0
    %2019 = vmatpush1.msra.mxu0 0.0
    %2020 = vmatprep.subr.mxu0 0.0
    %2021 = vmatpush1.msra.mxu0 0.0
    %2022 = vmatprep.subr.mxu0 0.0
    %2023 = vmatpush1.msra.mxu0 0.0
    %2024 = vmatprep.subr.mxu0 0.0
    %2025 = vmatpush1.msra.mxu0 0.0
    %2026 = vmatprep.subr.mxu0 0.0
    %2027 = vmatpush1.msra.mxu0 0.0
    %2028 = vmatprep.subr.mxu0 0.0
    %2029 = vmatpush1.msra.mxu0 0.0
    %2030 = vmatprep.subr.mxu0 0.0
    %2031 = vmatpush1.msra.mxu0 0.0
    %2032 = vmatprep.subr.mxu0 0.0
    %2033 = vmatpush1.msra.mxu0 0.0
    %2034 = vmatprep.subr.mxu0 0.0
    %2035 = vmatpush1.msra.mxu0 0.0
    %2036 = vmatprep.mubr.f32.mxu0 0.0
    %2037 = vmatmul.mubr.f32.gmra.mrb[0].mxu0 %v1970
    %v2038 = vpop.f32.mrb[0].mxu0
    %v2039 = vadd.f32 0.0, %v2038
    %v2040 = vpop.f32.mrb[0].mxu0
    %2041 = vdwg.mxu0
    %v2043 = vrot.slane %v2039, 4
    %v2045 = vadd.f32 %v1318, %v2043
    %v2046 = vxor.u32 %v2045, 2147483648
    %v2047 = vmul.f32 %v2046, 1.442695
    %v2048 = vpow.pop %v2047
    %v2049 = vadd.f32 %v2048, 1.0
    %v2050 = vrcp.pop %v2049
    %v2051 = vmul.f32 1.0, %v2050
    %v2052 = vtanh.pop %v2045
    %v2054 = vrot.slane %v1955, 6
    %v2056 = vmul.f32 %v2051, %v2054
    %2058 = vrot.lane.b32.xlu0 %v2052, 64
    %v2059 = vpop.permute.xlu0 %2058
    %v2061 = vmul.f32 %v2051, %v2059
    %2063 = vrot.lane.b32.xlu0 %v2061, 32
    %v2064 = vpop.permute.xlu0 %2063
    %v2066 = vadd.f32 %v2056, %v2064
    %v2067 = vtanh.pop %v2066
    %2069 = vrot.lane.b32.xlu0 %v2067, 64
    %v2070 = vpop.permute.xlu0 %2069
    %v2072 = vmul.f32 %v2051, %v2070
    %2074 = vrot.lane.b32.xlu0 %v2072, 32
    %v2075 = vpop.permute.xlu0 %2074
    %2077 = vst.msk [vmem:[%s1065 - $0x4] sm:$0x30] %vm622, %v2075
    %v2078 = vrot.slane %v2072, 4
    %2079 = vrot.lane.b32.xlu0 %v2078, 32
    %v2080 = vpop.permute.xlu0 %2079
    %v2081 = vsel %vm296, %v2080, 0
    %2083 = vmatprep.subr.mxu0 0.0
    %2084 = vmatpush1.msra.mxu0 %v1191
    %2085 = vmatprep.subr.mxu0 0.0
    %2086 = vmatpush1.msra.mxu0 %v1192
    %2087 = vmatprep.subr.mxu0 0.0
    %2088 = vmatpush1.msra.mxu0 %v1193
    %2089 = vmatprep.subr.mxu0 0.0
    %2090 = vmatpush1.msra.mxu0 %v1194
    %2091 = vmatprep.subr.mxu0 0.0
    %2092 = vmatpush1.msra.mxu0 0.0
    %2093 = vmatprep.subr.mxu0 0.0
    %2094 = vmatpush1.msra.mxu0 0.0
    %2095 = vmatprep.subr.mxu0 0.0
    %2096 = vmatpush1.msra.mxu0 0.0
    %2097 = vmatprep.subr.mxu0 0.0
    %2098 = vmatpush1.msra.mxu0 0.0
    %2099 = vmatprep.subr.mxu0 0.0
    %2100 = vmatpush1.msra.mxu0 0.0
    %2101 = vmatprep.subr.mxu0 0.0
    %2102 = vmatpush1.msra.mxu0 0.0
    %2103 = vmatprep.subr.mxu0 0.0
    %2104 = vmatpush1.msra.mxu0 0.0
    %2105 = vmatprep.subr.mxu0 0.0
    %2106 = vmatpush1.msra.mxu0 0.0
    %2107 = vmatprep.subr.mxu0 0.0
    %2108 = vmatpush1.msra.mxu0 0.0
    %2109 = vmatprep.subr.mxu0 0.0
    %2110 = vmatpush1.msra.mxu0 0.0
    %2111 = vmatprep.subr.mxu0 0.0
    %2112 = vmatpush1.msra.mxu0 0.0
    %2113 = vmatprep.subr.mxu0 0.0
    %2114 = vmatpush1.msra.mxu0 0.0
    %2115 = vmatprep.subr.mxu0 0.0
    %2116 = vmatpush1.msra.mxu0 0.0
    %2117 = vmatprep.subr.mxu0 0.0
    %2118 = vmatpush1.msra.mxu0 0.0
    %2119 = vmatprep.subr.mxu0 0.0
    %2120 = vmatpush1.msra.mxu0 0.0
    %2121 = vmatprep.subr.mxu0 0.0
    %2122 = vmatpush1.msra.mxu0 0.0
    %2123 = vmatprep.subr.mxu0 0.0
    %2124 = vmatpush1.msra.mxu0 0.0
    %2125 = vmatprep.subr.mxu0 0.0
    %2126 = vmatpush1.msra.mxu0 0.0
    %2127 = vmatprep.subr.mxu0 0.0
    %2128 = vmatpush1.msra.mxu0 0.0
    %2129 = vmatprep.subr.mxu0 0.0
    %2130 = vmatpush1.msra.mxu0 0.0
    %2131 = vmatprep.subr.mxu0 0.0
    %2132 = vmatpush1.msra.mxu0 0.0
    %2133 = vmatprep.subr.mxu0 0.0
    %2134 = vmatpush1.msra.mxu0 0.0
    %2135 = vmatprep.subr.mxu0 0.0
    %2136 = vmatpush1.msra.mxu0 0.0
    %2137 = vmatprep.subr.mxu0 0.0
    %2138 = vmatpush1.msra.mxu0 0.0
    %2139 = vmatprep.subr.mxu0 0.0
    %2140 = vmatpush1.msra.mxu0 0.0
    %2141 = vmatprep.subr.mxu0 0.0
    %2142 = vmatpush1.msra.mxu0 0.0
    %2143 = vmatprep.subr.mxu0 0.0
    %2144 = vmatpush1.msra.mxu0 0.0
    %2145 = vmatprep.subr.mxu0 0.0
    %2146 = vmatpush1.msra.mxu0 0.0
    %2147 = vmatprep.mubr.f32.mxu0 0.0
    %2148 = vmatmul.mubr.f32.gmra.mrb[0].mxu0 %v2081
    %v2149 = vpop.f32.mrb[0].mxu0
    %v2150 = vadd.f32 0.0, %v2149
    %v2151 = vpop.f32.mrb[0].mxu0
    %2152 = vdwg.mxu0
    %v2154 = vrot.slane %v2150, 2
    %v2156 = vadd.f32 %v1318, %v2154
    %v2157 = vxor.u32 %v2156, 2147483648
    %v2158 = vmul.f32 %v2157, 1.442695
    %v2159 = vpow.pop %v2158
    %v2160 = vadd.f32 %v2159, 1.0
    %v2161 = vrcp.pop %v2160
    %v2162 = vmul.f32 1.0, %v2161
    %v2163 = vtanh.pop %v2156
    %v2165 = vrot.slane %v2066, 6
    %v2167 = vmul.f32 %v2162, %v2165
    %2169 = vrot.lane.b32.xlu0 %v2163, 64
    %v2170 = vpop.permute.xlu0 %2169
    %v2172 = vmul.f32 %v2162, %v2170
    %2174 = vrot.lane.b32.xlu0 %v2172, 32
    %v2175 = vpop.permute.xlu0 %2174
    %v2177 = vadd.f32 %v2167, %v2175
    %v2178 = vtanh.pop %v2177
    %2180 = vrot.lane.b32.xlu0 %v2178, 64
    %v2181 = vpop.permute.xlu0 %2180
    %v2183 = vmul.f32 %v2162, %v2181
    %2185 = vrot.lane.b32.xlu0 %v2183, 32
    %v2186 = vpop.permute.xlu0 %2185
    %2188 = vst.msk [vmem:[%s1177 - $0x6] sm:$0xc0] %vm735, %v2186
    %v2189 = vld [vmem:[#allocation9 + $0x20] sm:$0xff]
    %v2190 = vld [vmem:[#allocation9 + $0x28] sm:$0xff]
    %v2191 = vld [vmem:[#allocation9 + $0x30] sm:$0xff]
    %v2192 = vld [vmem:[#allocation9 + $0x38] sm:$0xff]
    %v2193 = vld [vmem:[#allocation9 + $0x40] sm:$0xff]
    %v2194 = vld [vmem:[#allocation9 + $0x48] sm:$0xff]
    %v2195 = vld [vmem:[#allocation9 + $0x50] sm:$0xff]
    %v2196 = vld [vmem:[#allocation9 + $0x58] sm:$0xff]
    %v2197 = vld [vmem:[#allocation9 + $0x60] sm:$0xff]
    %v2198 = vld [vmem:[#allocation9 + $0x68] sm:$0xff]
    %v2199 = vld [vmem:[#allocation9 + $0x70] sm:$0xff]
    %v2200 = vld [vmem:[#allocation9 + $0x78] sm:$0xff]
    %v2201 = vld [vmem:[#allocation9 + $0x80] sm:$0xff]
    %v2202 = vld [vmem:[#allocation9 + $0x88] sm:$0xff]
    %v2203 = vld [vmem:[#allocation9 + $0x90] sm:$0xff]
    %v2204 = vld [vmem:[#allocation9 + $0x98] sm:$0xff]
    %v2205 = vld [vmem:[#allocation9 + $0xa0] sm:$0xff]
    %v2206 = vld [vmem:[#allocation9 + $0xa8] sm:$0xff]
    %v2207 = vld [vmem:[#allocation9 + $0xb0] sm:$0xff]
    %v2208 = vld [vmem:[#allocation9 + $0xb8] sm:$0xff]
    %v2209 = vld [vmem:[#allocation9 + $0xc0] sm:$0x1]
    %v2210 = vrot.slane %v2183, 6
    %2211 = vrot.lane.b32.xlu0 %v2210, 32
    %v2212 = vpop.permute.xlu0 %2211
    %v2213 = vsel %vm296, %v2212, 0
    %2215 = vmatprep.subr.mxu0 0.0
    %2216 = vmatpush1.msra.mxu0 %v2205
    %2217 = vmatprep.subr.mxu0 0.0
    %2218 = vmatpush1.msra.mxu0 %v2206
    %2219 = vmatprep.subr.mxu0 0.0
    %2220 = vmatpush1.msra.mxu0 %v2207
    %2221 = vmatprep.subr.mxu0 0.0
    %2222 = vmatpush1.msra.mxu0 %v2208
    %2223 = vmatprep.subr.mxu0 0.0
    %2224 = vmatpush1.msra.mxu0 0.0
    %2225 = vmatprep.subr.mxu0 0.0
    %2226 = vmatpush1.msra.mxu0 0.0
    %2227 = vmatprep.subr.mxu0 0.0
    %2228 = vmatpush1.msra.mxu0 0.0
    %2229 = vmatprep.subr.mxu0 0.0
    %2230 = vmatpush1.msra.mxu0 0.0
    %2231 = vmatprep.subr.mxu0 0.0
    %2232 = vmatpush1.msra.mxu0 0.0
    %2233 = vmatprep.subr.mxu0 0.0
    %2234 = vmatpush1.msra.mxu0 0.0
    %2235 = vmatprep.subr.mxu0 0.0
    %2236 = vmatpush1.msra.mxu0 0.0
    %2237 = vmatprep.subr.mxu0 0.0
    %2238 = vmatpush1.msra.mxu0 0.0
    %2239 = vmatprep.subr.mxu0 0.0
    %2240 = vmatpush1.msra.mxu0 0.0
    %2241 = vmatprep.subr.mxu0 0.0
    %2242 = vmatpush1.msra.mxu0 0.0
    %2243 = vmatprep.subr.mxu0 0.0
    %2244 = vmatpush1.msra.mxu0 0.0
    %2245 = vmatprep.subr.mxu0 0.0
    %2246 = vmatpush1.msra.mxu0 0.0
    %2247 = vmatprep.subr.mxu0 0.0
    %2248 = vmatpush1.msra.mxu0 0.0
    %2249 = vmatprep.subr.mxu0 0.0
    %2250 = vmatpush1.msra.mxu0 0.0
    %2251 = vmatprep.subr.mxu0 0.0
    %2252 = vmatpush1.msra.mxu0 0.0
    %2253 = vmatprep.subr.mxu0 0.0
    %2254 = vmatpush1.msra.mxu0 0.0
    %2255 = vmatprep.subr.mxu0 0.0
    %2256 = vmatpush1.msra.mxu0 0.0
    %2257 = vmatprep.subr.mxu0 0.0
    %2258 = vmatpush1.msra.mxu0 0.0
    %2259 = vmatprep.subr.mxu0 0.0
    %2260 = vmatpush1.msra.mxu0 0.0
    %2261 = vmatprep.subr.mxu0 0.0
    %2262 = vmatpush1.msra.mxu0 0.0
    %2263 = vmatprep.subr.mxu0 0.0
    %2264 = vmatpush1.msra.mxu0 0.0
    %2265 = vmatprep.subr.mxu0 0.0
    %2266 = vmatpush1.msra.mxu0 0.0
    %2267 = vmatprep.subr.mxu0 0.0
    %2268 = vmatpush1.msra.mxu0 0.0
    %2269 = vmatprep.subr.mxu0 0.0
    %2270 = vmatpush1.msra.mxu0 0.0
    %2271 = vmatprep.subr.mxu0 0.0
    %2272 = vmatpush1.msra.mxu0 0.0
    %2273 = vmatprep.subr.mxu0 0.0
    %2274 = vmatpush1.msra.mxu0 0.0
    %2275 = vmatprep.subr.mxu0 0.0
    %2276 = vmatpush1.msra.mxu0 0.0
    %2277 = vmatprep.subr.mxu0 0.0
    %2278 = vmatpush1.msra.mxu0 0.0
    %2279 = vmatprep.mubr.f32.mxu0 0.0
    %2280 = vmatmul.mubr.f32.gmra.mrb[0].mxu0 %v2213
    %v2281 = vpop.f32.mrb[0].mxu0
    %v2282 = vadd.f32 0.0, %v2281
    %v2283 = vpop.f32.mrb[0].mxu0
    %2284 = vdwg.mxu0
    %2285 = vmatprep.subr.mxu0 0.0
    %2286 = vmatpush1.msra.mxu0 %v2189
    %2287 = vmatprep.subr.mxu0 0.0
    %2288 = vmatpush1.msra.mxu0 %v2190
    %2289 = vmatprep.subr.mxu0 0.0
    %2290 = vmatpush1.msra.mxu0 %v2191
    %2291 = vmatprep.subr.mxu0 0.0
    %2292 = vmatpush1.msra.mxu0 %v2192
    %2293 = vmatprep.subr.mxu0 0.0
    %2294 = vmatpush1.msra.mxu0 %v2193
    %2295 = vmatprep.subr.mxu0 0.0
    %2296 = vmatpush1.msra.mxu0 %v2194
    %2297 = vmatprep.subr.mxu0 0.0
    %2298 = vmatpush1.msra.mxu0 %v2195
    %2299 = vmatprep.subr.mxu0 0.0
    %2300 = vmatpush1.msra.mxu0 %v2196
    %2301 = vmatprep.subr.mxu0 0.0
    %2302 = vmatpush1.msra.mxu0 %v2197
    %2303 = vmatprep.subr.mxu0 0.0
    %2304 = vmatpush1.msra.mxu0 %v2198
    %2305 = vmatprep.subr.mxu0 0.0
    %2306 = vmatpush1.msra.mxu0 %v2199
    %2307 = vmatprep.subr.mxu0 0.0
    %2308 = vmatpush1.msra.mxu0 %v2200
    %2309 = vmatprep.subr.mxu0 0.0
    %2310 = vmatpush1.msra.mxu0 %v2201
    %2311 = vmatprep.subr.mxu0 0.0
    %2312 = vmatpush1.msra.mxu0 %v2202
    %2313 = vmatprep.subr.mxu0 0.0
    %2314 = vmatpush1.msra.mxu0 %v2203
    %2315 = vmatprep.subr.mxu0 0.0
    %2316 = vmatpush1.msra.mxu0 %v2204
    %2317 = vmatprep.subr.mxu0 0.0
    %2318 = vmatpush1.msra.mxu0 0.0
    %2319 = vmatprep.subr.mxu0 0.0
    %2320 = vmatpush1.msra.mxu0 0.0
    %2321 = vmatprep.subr.mxu0 0.0
    %2322 = vmatpush1.msra.mxu0 0.0
    %2323 = vmatprep.subr.mxu0 0.0
    %2324 = vmatpush1.msra.mxu0 0.0
    %2325 = vmatprep.subr.mxu0 0.0
    %2326 = vmatpush1.msra.mxu0 0.0
    %2327 = vmatprep.subr.mxu0 0.0
    %2328 = vmatpush1.msra.mxu0 0.0
    %2329 = vmatprep.subr.mxu0 0.0
    %2330 = vmatpush1.msra.mxu0 0.0
    %2331 = vmatprep.subr.mxu0 0.0
    %2332 = vmatpush1.msra.mxu0 0.0
    %2333 = vmatprep.subr.mxu0 0.0
    %2334 = vmatpush1.msra.mxu0 0.0
    %2335 = vmatprep.subr.mxu0 0.0
    %2336 = vmatpush1.msra.mxu0 0.0
    %2337 = vmatprep.subr.mxu0 0.0
    %2338 = vmatpush1.msra.mxu0 0.0
    %2339 = vmatprep.subr.mxu0 0.0
    %2340 = vmatpush1.msra.mxu0 0.0
    %2341 = vmatprep.subr.mxu0 0.0
    %2342 = vmatpush1.msra.mxu0 0.0
    %2343 = vmatprep.subr.mxu0 0.0
    %2344 = vmatpush1.msra.mxu0 0.0
    %2345 = vmatprep.subr.mxu0 0.0
    %2346 = vmatpush1.msra.mxu0 0.0
    %2347 = vmatprep.subr.mxu0 0.0
    %2348 = vmatpush1.msra.mxu0 0.0
    %2349 = vmatprep.mubr.f32.mxu0 0.0
    %2350 = vmatmul.mubr.f32.gmra.mrb[0].mxu0 %v154
    %v2351 = vpop.f32.mrb[0].mxu0
    %v2352 = vadd.f32 %v2282, %v2351
    %v2353 = vpop.f32.mrb[0].mxu0
    %2354 = vdwg.mxu0
    %v2355 = vlaneseq
    %v2356 = vshrl.u32 %v2355, 7
    %v2357 = vsub.s32 0, %v2356
    %v2358 = vrot.slane %v2209, %v2357
    %v2359 = vadd.f32 %v2352, %v2358
    %v2360 = vxor.u32 %v2359, 2147483648
    %v2361 = vmul.f32 %v2360, 1.442695
    %v2362 = vpow.pop %v2361
    %v2363 = vadd.f32 %v2362, 1.0
    %v2364 = vrcp.pop %v2363
    %v2365 = vmul.f32 1.0, %v2364
    %2366 = vst [vmem:[#allocation11] sm:$0x3] %v2365
    // Predicated region
    $region34: #{tpu_custom_call.1} parent=1 // pred_check
      _
    $region35: #{tpu_custom_call.1} parent=1 // pred_check_branch
      %2368 = sbr.rel (0) target = $region37
    $region36: #{tpu_custom_call.1} parent=1 // pred_region
      %s2370 = ssub.s32 32, 32
      %2371 = vsyncadd [#allocation5], %s2370
      %s2373 = sshll.u32 [#allocation11], 4
      %s2374 = int_to_ptr.vmem [resolvable:$true] %s2373
      %2376 = dma.vmem_to_hbm [thread:$0]  %s2374, 32, %s4, [#allocation5]
    $region37: #{tpu_custom_call.1} parent=1 // pred_fallthru
      _
    // Predicated region
    $region38: #{tpu_custom_call.1} parent=1 // pred_check
      _
    $region39: #{tpu_custom_call.1} parent=1 // pred_check_branch
      %2378 = sbr.rel (0) target = $region41
    $region40: #{tpu_custom_call.1} parent=1 // pred_region
      %2379 = dma.done [#allocation5], 32
    $region41: #{tpu_custom_call.1} parent=1 // pred_fallthru
      _
    %2380 = vsyncpa [#allocation4], 1
    %2381 = vsyncpa [#allocation7], 1
    %2382 = vsyncpa [#allocation10], 1
    %2383 = vsyncpa [#allocation5], 1

</llo_original>
